<compile_context>
chip_gen: v7x
topology: tpu7x:2x2x1
jax: 0.10.0
libtpu: 0.0.40
codegen_flags: <defaults>
</compile_context>

<pallas_src>
import functools

import jax
import jax.numpy as jnp
from jax.experimental import pallas as pl
from jax.experimental.pallas import tpu as pltpu


def _round_up(x, m):
    return (x + m - 1) // m * m


def sgc_kernel(a_ref, xw_ref, b_ref, o_ref, *, tk, c_valid):
    """One (row-tile, k-tile) step of  out = log_softmax(A @ XW + b, axis=1).

    a_ref : (tm, tk)      bf16   A_norm tile (streamed)
    xw_ref: (n_k, c_pad)  bf16   full XW, VMEM-resident (constant index_map)
    b_ref : (1, c_pad)    f32    bias
    o_ref : (tm, c_pad)   f32    output tile; doubles as the f32 accumulator
                                 (resident across the k axis).
    """
    k = pl.program_id(1)

    @pl.when(k == 0)
    def _():
        o_ref[...] = jnp.zeros_like(o_ref)

    # Slice the resident XW at this k tile (aligned dynamic slice).
    off = pl.multiple_of(k * tk, tk)
    xw_tile = xw_ref[pl.ds(off, tk), :]

    # MXU accumulate: bf16 x bf16 -> f32, directly into the resident output.
    o_ref[...] += jnp.dot(a_ref[...], xw_tile, preferred_element_type=jnp.float32)

    @pl.when(k == pl.num_programs(1) - 1)
    def _():
        z = o_ref[...] + b_ref[...]
        # Mask padded class lanes so they do not disturb the softmax.
        lane = jax.lax.broadcasted_iota(jnp.int32, z.shape, dimension=1)
        z = jnp.where(lane < c_valid, z, jnp.full_like(z, -jnp.inf))
        m = jnp.max(z, axis=1, keepdims=True)
        e = jnp.exp(z - m)
        lse = jnp.log(jnp.sum(e, axis=1, keepdims=True)) + m
        o_ref[...] = z - lse


def gcn_norm_dense_padded(edge_index, num_nodes, n_row, n_k):
    """Dense D^{-1/2}(A+I)D^{-1/2}, scattered directly into the padded
    (n_row, n_k) buffer and cast to bf16 (matches PyG gcn_norm, add_self_loops)."""
    src, dst = edge_index[0], edge_index[1]
    loop = jnp.arange(num_nodes, dtype=src.dtype)
    src = jnp.concatenate([src, loop])
    dst = jnp.concatenate([dst, loop])
    ew = jnp.ones(src.shape[0], dtype=jnp.float32)
    deg = jnp.zeros((num_nodes,), jnp.float32).at[dst].add(ew)
    dinv = jnp.where(deg > 0, 1.0 / jnp.sqrt(deg), 0.0)
    norm = dinv[src] * ew * dinv[dst]
    a = jnp.zeros((n_row, n_k), jnp.float32).at[dst, src].add(norm)
    return a.astype(jnp.bfloat16)


def sgc_forward(edge_index, x, w, b, *, tm=512, tk=512):
    """log_softmax((A_norm @ (X @ W)) + b, axis=1) via a tiled Pallas kernel."""
    n = x.shape[0]
    c = w.shape[1]

    n128 = _round_up(n, 128)
    # Contraction tile: as large as possible (256-aligned helps v6e/v7x MXU).
    tk = _round_up(min(tk, n128), 128)
    # Row tile: large, but keep >= 2 row tiles when the graph permits so the
    # "parallel" axis actually splits across both v7x TensorCores.
    tm = min(tm, n128)
    if n128 >= 256 and _round_up(n, tm) // tm < 2:
        tm = _round_up(n128 // 2, 128)

    n_row = _round_up(n, tm)
    n_k = _round_up(n, tk)
    c_pad = _round_up(c, 128)  # lane-dense epilogue / stores

    # Padded bf16 adjacency built in place (no extra pad/copy pass over N^2).
    a_p = gcn_norm_dense_padded(edge_index, n, n_row, n_k)

    # Reassociation: tiny (F, C) matmul done once outside the hot loop.
    xw = jnp.dot(x, w, preferred_element_type=jnp.float32)
    xw_p = jnp.zeros((n_k, c_pad), jnp.bfloat16).at[:n, :c].set(
        xw.astype(jnp.bfloat16)
    )
    b_p = jnp.zeros((1, c_pad), jnp.float32).at[:, :c].set(b)

    grid = (n_row // tm, n_k // tk)

    # VMEM budget: double-buffered A tile + resident XW + resident f32 out tile.
    vmem_bytes = (
        2 * tm * tk * 2        # A tiles (bf16, double buffered)
        + 2 * n_k * c_pad * 2  # XW (resident; budget 2 buffers to be safe)
        + 2 * tm * c_pad * 4   # output tile (f32)
        + 2 * c_pad * 4        # bias
    )
    vmem_limit = int(min(max(vmem_bytes * 2, 16 << 20), 48 << 20))

    cost = pl.CostEstimate(
        flops=2 * n_row * n_k * c_pad,
        transcendentals=n_row * c_pad,  # exp in the softmax epilogue
        bytes_accessed=n_row * n_k * 2 + n_k * c_pad * 2 + n_row * c_pad * 4,
    )

    out = pl.pallas_call(
        functools.partial(sgc_kernel, tk=tk, c_valid=c),
        out_shape=jax.ShapeDtypeStruct((n_row, c_pad), jnp.float32),
        grid_spec=pltpu.PrefetchScalarGridSpec(
            num_scalar_prefetch=0,
            grid=grid,
            in_specs=[
                pl.BlockSpec((tm, tk), lambda i, k: (i, k)),        # A row/k tile
                pl.BlockSpec((n_k, c_pad), lambda i, k: (0, 0)),    # XW, resident
                pl.BlockSpec((1, c_pad), lambda i, k: (0, 0)),      # bias
            ],
            out_specs=pl.BlockSpec((tm, c_pad), lambda i, k: (i, 0)),
        ),
        compiler_params=pltpu.CompilerParams(
            dimension_semantics=("parallel", "arbitrary"),
            vmem_limit_bytes=vmem_limit,
        ),
        cost_estimate=cost,
    )(a_p, xw_p, b_p)

    return out[:n, :c]


if __name__ == "__main__":
    # Small synthetic "Planetoid-like" graph (deterministic, in-script).
    N = 300   # nodes (non-multiple of tile size -> exercises padding)
    F = 64    # num_features
    C = 7     # num_classes (Cora-like, non-multiple of 128 -> lane padding)

    key = jax.random.PRNGKey(0)
    kx, kw, kb = jax.random.split(key, 3)

    x = jax.random.normal(kx, (N, F), dtype=jnp.float32)

    # Undirected ring + chords, stored as directed edges both ways.
    ring_src = jnp.arange(N, dtype=jnp.int32)
    ring_dst = (ring_src + 1) % N
    chord_src = jnp.arange(0, N, 7, dtype=jnp.int32)
    chord_dst = (chord_src * 3 + 11) % N
    src = jnp.concatenate([ring_src, ring_dst, chord_src, chord_dst])
    dst = jnp.concatenate([ring_dst, ring_src, chord_dst, chord_src])
    edge_index = jnp.stack([src, dst], axis=0)

    # SGConv linear params (torch Linear weight is (C, F); kept transposed).
    w = jax.random.normal(kw, (F, C), dtype=jnp.float32) * (1.0 / jnp.sqrt(F))
    b = jax.random.normal(kb, (1, C), dtype=jnp.float32) * 0.01

    out = jax.block_until_ready(sgc_forward(edge_index, x, w, b))

    # Pure-JAX reference with the same bf16 streaming of A and XW.
    # (bf16 on the N^2 operand deviates slightly from the f32 PyTorch SGConv;
    #  acceptable for classification logits.)
    def ref_a_norm(edge_index, num_nodes):
        s, d = edge_index[0], edge_index[1]
        loop = jnp.arange(num_nodes, dtype=s.dtype)
        s = jnp.concatenate([s, loop])
        d = jnp.concatenate([d, loop])
        ew = jnp.ones(s.shape[0], dtype=jnp.float32)
        deg = jnp.zeros((num_nodes,), jnp.float32).at[d].add(ew)
        dinv = jnp.where(deg > 0, 1.0 / jnp.sqrt(deg), 0.0)
        norm = dinv[s] * ew * dinv[d]
        return jnp.zeros((num_nodes, num_nodes), jnp.float32).at[d, s].add(norm)

    a_norm = ref_a_norm(edge_index, N)
    xw_ref = jnp.dot(x, w, preferred_element_type=jnp.float32)
    a_bf = a_norm.astype(jnp.bfloat16).astype(jnp.float32)
    xw_bf = xw_ref.astype(jnp.bfloat16).astype(jnp.float32)
    z_ref = jnp.dot(a_bf, xw_bf, precision=jax.lax.Precision.HIGHEST) + b
    ref = jax.nn.log_softmax(z_ref, axis=1)

    assert out.shape == (N, C)
    err = float(jnp.max(jnp.abs(out - ref)))
    assert jnp.allclose(out, ref, atol=2e-4, rtol=2e-4), err

    print("KERNEL_OK")
</pallas_src>

<mosaic_0001>
module attributes {stable_mosaic.version = 11 : i64} {
  func.func @sgc_kernel(%arg0: i32, %arg1: i32, %arg2: memref<256x384xbf16, #tpu.memory_space<vmem>>, %arg3: memref<384x128xbf16, #tpu.memory_space<vmem>>, %arg4: memref<1x128xf32, #tpu.memory_space<vmem>>, %arg5: memref<256x128xf32, #tpu.memory_space<vmem>>) attributes {dimension_semantics = [#tpu.dimension_semantics<parallel>, #tpu.dimension_semantics<arbitrary>], iteration_bounds = array<i64: 2, 1>, scalar_prefetch = 0 : i64, scratch_operands = 0 : i64, tpu.core_type = #tpu.core_type<tc>, window_params = [{transform_indices = @transform_0, window_bounds = array<i64: 256, 384>}, {pipeline_mode = #tpu.pipeline_mode<synchronous>, transform_indices = @transform_1, window_bounds = array<i64: 384, 128>}, {pipeline_mode = #tpu.pipeline_mode<synchronous>, transform_indices = @transform_2, window_bounds = array<i64: 1, 128>}, {transform_indices = @transform_3, window_bounds = array<i64: 256, 128>}]} {
    %c0_i32 = arith.constant 0 : i32
    %0 = arith.cmpi eq, %arg1, %c0_i32 : i32
    %1 = arith.extui %0 : i1 to i32
    %c0_i32_0 = arith.constant 0 : i32
    %2 = arith.cmpi ne, %1, %c0_i32_0 : i32
    scf.if %2 {
      %cst_9 = arith.constant 0.000000e+00 : f32
      %15 = vector.broadcast %cst_9 : f32 to vector<256x128xf32>
      %c0_10 = arith.constant 0 : index
      %c0_11 = arith.constant 0 : index
      %16 = vector.load %arg5[%c0_10, %c0_11] : memref<256x128xf32, #tpu.memory_space<vmem>>, vector<256x128xf32>
      tpu.vector_store %arg5[%c0_10, %c0_11], %15 {strides = array<i32>} : memref<256x128xf32, #tpu.memory_space<vmem>>, vector<256x128xf32>,
    } else {
    }
    %c384_i32 = arith.constant 384 : i32
    %3 = arith.muli %arg1, %c384_i32 : i32
    %4 = tpu.assume_multiple %3, 384 : i32
    %5 = arith.index_cast %4 : i32 to index
    %c0 = arith.constant 0 : index
    %6 = vector.load %arg3[%5, %c0] : memref<384x128xbf16, #tpu.memory_space<vmem>>, vector<384x128xbf16>
    %c0_1 = arith.constant 0 : index
    %c0_2 = arith.constant 0 : index
    %7 = vector.load %arg5[%c0_1, %c0_2] : memref<256x128xf32, #tpu.memory_space<vmem>>, vector<256x128xf32>
    %c0_3 = arith.constant 0 : index
    %c0_4 = arith.constant 0 : index
    %8 = vector.load %arg2[%c0_3, %c0_4] : memref<256x384xbf16, #tpu.memory_space<vmem>>, vector<256x384xbf16>
    %cst = arith.constant dense<0.000000e+00> : vector<256x128xf32>
    %9 = tpu.matmul %8, %6, %cst {dimension_numbers = #tpu.dot_dimension_numbers<[1], [0], [0], [1], [0, 0, 1, 1], [], []>} : vector<256x384xbf16>, vector<384x128xbf16>, vector<256x128xf32> -> vector<256x128xf32>
    %10 = arith.addf %7, %9 : vector<256x128xf32>
    %c0_5 = arith.constant 0 : index
    %c0_6 = arith.constant 0 : index
    %11 = vector.load %arg5[%c0_5, %c0_6] : memref<256x128xf32, #tpu.memory_space<vmem>>, vector<256x128xf32>
    tpu.vector_store %arg5[%c0_5, %c0_6], %10 {strides = array<i32>} : memref<256x128xf32, #tpu.memory_space<vmem>>, vector<256x128xf32>,
    %c0_i32_7 = arith.constant 0 : i32
    %12 = arith.cmpi eq, %arg1, %c0_i32_7 : i32
    %13 = arith.extui %12 : i1 to i32
    %c0_i32_8 = arith.constant 0 : i32
    %14 = arith.cmpi ne, %13, %c0_i32_8 : i32
    scf.if %14 {
      %c0_9 = arith.constant 0 : index
      %c0_10 = arith.constant 0 : index
      %15 = vector.load %arg5[%c0_9, %c0_10] : memref<256x128xf32, #tpu.memory_space<vmem>>, vector<256x128xf32>
      %c0_11 = arith.constant 0 : index
      %c0_12 = arith.constant 0 : index
      %16 = vector.load %arg4[%c0_11, %c0_12] : memref<1x128xf32, #tpu.memory_space<vmem>>, vector<1x128xf32>
      %17 = vector.broadcast %16 : vector<1x128xf32> to vector<256x128xf32>
      %18 = arith.addf %15, %17 : vector<256x128xf32>
      %19 = tpu.iota {dimensions = array<i32: 1>} : vector<256x128xi32>
      %c7_i32 = arith.constant 7 : i32
      %20 = vector.broadcast %c7_i32 : i32 to vector<256x128xi32>
      %21 = arith.cmpi slt, %19, %20 : vector<256x128xi32>
      %cst_13 = arith.constant 0xFF800000 : f32
      %22 = vector.broadcast %cst_13 : f32 to vector<256x128xf32>
      %23 = arith.select %21, %18, %22 : vector<256x128xi1>, vector<256x128xf32>
      %cst_14 = arith.constant dense<0xFF800000> : vector<256xf32>
      %24 = vector.multi_reduction <maximumf>, %23, %cst_14 [1] : vector<256x128xf32> to vector<256xf32>
      %25 = vector.shape_cast %24 : vector<256xf32> to vector<256x1xf32>
      %26 = vector.broadcast %25 : vector<256x1xf32> to vector<256x128xf32>
      %27 = arith.subf %23, %26 : vector<256x128xf32>
      %28 = math.exp %27 : vector<256x128xf32>
      %cst_15 = arith.constant dense<0.000000e+00> : vector<256xf32>
      %29 = vector.multi_reduction <add>, %28, %cst_15 [1] : vector<256x128xf32> to vector<256xf32>
      %30 = vector.shape_cast %29 : vector<256xf32> to vector<256x1xf32>
      %31 = math.log %30 : vector<256x1xf32>
      %32 = arith.addf %31, %25 : vector<256x1xf32>
      %33 = vector.broadcast %32 : vector<256x1xf32> to vector<256x128xf32>
      %34 = arith.subf %23, %33 : vector<256x128xf32>
      %c0_16 = arith.constant 0 : index
      %c0_17 = arith.constant 0 : index
      %35 = vector.load %arg5[%c0_16, %c0_17] : memref<256x128xf32, #tpu.memory_space<vmem>>, vector<256x128xf32>
      tpu.vector_store %arg5[%c0_16, %c0_17], %34 {strides = array<i32>} : memref<256x128xf32, #tpu.memory_space<vmem>>, vector<256x128xf32>,
    } else {
    }
    return
  }
  func.func @transform_0(%arg0: i32, %arg1: i32) -> (i32, i32) {
    %c0_i32 = arith.constant 0 : i32
    return %arg0, %arg1 : i32, i32
  }
  func.func @transform_1(%arg0: i32, %arg1: i32) -> (i32, i32) {
    %c0_i32 = arith.constant 0 : i32
    %c0_i32_0 = arith.constant 0 : i32
    %c0_i32_1 = arith.constant 0 : i32
    return %c0_i32, %c0_i32_0 : i32, i32
  }
  func.func @transform_2(%arg0: i32, %arg1: i32) -> (i32, i32) {
    %c0_i32 = arith.constant 0 : i32
    %c0_i32_0 = arith.constant 0 : i32
    %c0_i32_1 = arith.constant 0 : i32
    return %c0_i32, %c0_i32_0 : i32, i32
  }
  func.func @transform_3(%arg0: i32, %arg1: i32) -> (i32, i32) {
    %c0_i32 = arith.constant 0 : i32
    %c0_i32_0 = arith.constant 0 : i32
    return %arg0, %c0_i32 : i32, i32
  }
}

</mosaic_0001>

<llo_original>
// kernel: tpu_custom_call.1
$region0: #{tpu_custom_call.1}
  #allocation0 [shape = 'u32[]', space=smem, size = 0x4, offset = 0x4, fixed_abs, tag = 'smem constant byte address 0x4 - core index']
  #allocation1 [shape = 'u32[144,128]{1,0:T(1,128)}', space=vmem, size = 0x12000, scoped, tag = 'internal scratch']
  %s0 = inlined_call_operand.hbm [shape: bf16[512,384], index: 0, kind: input, shape index: {}]
  %s1 = inlined_call_operand.hbm [shape: bf16[384,128], index: 1, kind: input, shape index: {}]
  %s2 = inlined_call_operand.vmem [shape: f32[1,128], index: 2, kind: input, shape index: {}]
  %s3 = inlined_call_operand.hbm [shape: f32[512,128], index: 3, kind: output, shape index: {}]
  %s4 = sld [smem:[#allocation0]]
  $region61: #{tpu_custom_call.1} parent=0
    _
  %s6 = ssub.s32 1, %s4
  %s7 = scalar_select 0, %s6, %s4
  $region1: #{tpu_custom_call.1} parent=0
    #allocation2 [shape = 'u8[393216]{0}', space=vmem, size = 0x60000, scoped, tag = 'input window, operand 0']
    #allocation3 [shape = 's32[2]{0}', space=sflag, size = 0x8, scoped, tag = 'scoped memory for tpu_custom_call.1']
    #allocation4 [shape = 's32[2]{0}', space=sflag, size = 0x8, scoped, tag = 'scoped memory for tpu_custom_call.1']
    #allocation5 [shape = 'u8[98304]{0}', space=vmem, size = 0x18000, scoped, tag = 'input window, operand 1, single buffered']
    #allocation6 [shape = 's32[1]{0}', space=sflag, size = 0x4, scoped, tag = 'scoped memory for tpu_custom_call.1']
    #allocation7 [shape = 'u8[262144]{0}', space=vmem, size = 0x40000, scoped, tag = 'output window, operand 0']
    %8 = vsyncpa [#allocation3], 0
    %s9 = scalar_lea.sflag [#allocation3], 1
    %10 = vsyncpa %s9, 0
    %11 = vsyncpa [#allocation6], 0
    %12 = vsyncpa [#allocation4], 0
    %s13 = scalar_lea.sflag [#allocation4], 1
    %14 = vsyncpa %s13, 0
    loop: start=0, step=1, limit=4
    $region2: #{tpu_custom_call.1} parent=1 // loop_pre_header
      _
    $region3: #{tpu_custom_call.1} parent=1 // loop_header
      %s16 = sphi 0, %s20
      %p17 = scmp.ge.s32.totalorder %s16, 4
      %s23 = sphi 0, %s35
      %s24 = sphi 0, %s31
      %s25 = sphi 0, %s23
      %s26 = sphi 0, %s24
      %s27 = sphi 0, %s25
      %s28 = sphi 0, %s26
      %s40 = sphi 0, %s42
      %s43 = sphi 0, %s40
      %s44 = sphi 0, %s43
      %s60 = sphi 0, %s44
      %s64 = sphi 0, %s64
      %s66 = sphi 0, %s64
      %s67 = sphi 0, %s66
      %s81 = sphi 0, %s67
      %s85 = sphi 0, %s85
      %s87 = sphi 0, %s85
      %s88 = sphi 0, %s87
      %s102 = sphi 0, %s88
      %s108 = sphi 0, %s110
      %s111 = sphi 0, %s108
      %s112 = sphi 0, %s111
      %s128 = sphi 0, %s112
    $region4: #{tpu_custom_call.1} parent=1 // loop_header_branch
      %19 = sbr.rel (%p17) target = $region8
    $region5: #{tpu_custom_call.1} parent=1 // loop_body
      %s21 = ssub.s32 %s16, 1
      %s22 = ssub.s32 %s16, 2
      %s29 = sadd.s32 1, %s24
      %p30 = scmp.ge.s32.totalorder %s29, 1
      %s31 = scalar_select %p30, 0, %s29
      %s32 = sadd.s32 1, %s23
      %s33 = scalar_select %p30, %s32, %s23
      %p34 = scmp.ge.s32.totalorder %s33, 2
      %s35 = scalar_select %p34, 0, %s33
      %s36 = ssub.s32 %s23, %s35
      %s37 = ssub.s32 %s24, %s31
      %s38 = sor.u32 %s36, %s37
      %p39 = scmp.eq.s32.totalorder %s38, 0
      %s41 = sadd.s32 %s40, 1
      %s42 = scalar_select %p39, %s40, %s41
      %p45 = pneg %p39
      %p46 = scmp.eq.s32.totalorder %s16, 1
      %p47 = por %p45, %p46
      %p48 = scmp.ne.s32.totalorder %s40, %s43
      %p49 = scmp.eq.s32.totalorder %s16, 0
      %p50 = por %p48, %p49
      %p51 = scmp.ne.s32.totalorder %s40, %s43
      %p52 = scmp.eq.s32.totalorder %s21, 1
      %p53 = por %p51, %p52
      %p54 = scmp.ne.s32.totalorder %s43, %s44
      %p55 = scmp.eq.s32.totalorder %s21, 0
      %p56 = por %p54, %p55
      %p57 = scmp.ne.s32.totalorder %s43, %s44
      %p58 = scmp.eq.s32.totalorder %s22, 1
      %p59 = por %p57, %p58
      %p61 = scmp.ne.s32.totalorder %s44, %s60
      %p62 = scmp.eq.s32.totalorder %s22, 0
      %p63 = por %p61, %p62
      %s65 = sadd.s32 %s64, 1
      %p68 = scmp.eq.s32.totalorder %s16, 1
      %p69 = scmp.ne.s32.totalorder %s64, %s66
      %p70 = scmp.eq.s32.totalorder %s16, 0
      %p71 = por %p69, %p70
      %p72 = scmp.ne.s32.totalorder %s64, %s66
      %p73 = scmp.eq.s32.totalorder %s21, 1
      %p74 = por %p72, %p73
      %p75 = scmp.ne.s32.totalorder %s66, %s67
      %p76 = scmp.eq.s32.totalorder %s21, 0
      %p77 = por %p75, %p76
      %p78 = scmp.ne.s32.totalorder %s66, %s67
      %p79 = scmp.eq.s32.totalorder %s22, 1
      %p80 = por %p78, %p79
      %p82 = scmp.ne.s32.totalorder %s67, %s81
      %p83 = scmp.eq.s32.totalorder %s22, 0
      %p84 = por %p82, %p83
      %s86 = sadd.s32 %s85, 1
      %p89 = scmp.eq.s32.totalorder %s16, 1
      %p90 = scmp.ne.s32.totalorder %s85, %s87
      %p91 = scmp.eq.s32.totalorder %s16, 0
      %p92 = por %p90, %p91
      %p93 = scmp.ne.s32.totalorder %s85, %s87
      %p94 = scmp.eq.s32.totalorder %s21, 1
      %p95 = por %p93, %p94
      %p96 = scmp.ne.s32.totalorder %s87, %s88
      %p97 = scmp.eq.s32.totalorder %s21, 0
      %p98 = por %p96, %p97
      %p99 = scmp.ne.s32.totalorder %s87, %s88
      %p100 = scmp.eq.s32.totalorder %s22, 1
      %p101 = por %p99, %p100
      %p103 = scmp.ne.s32.totalorder %s88, %s102
      %p104 = scmp.eq.s32.totalorder %s22, 0
      %p105 = por %p103, %p104
      %s106 = ssub.s32 %s23, %s35
      %p107 = scmp.eq.s32.totalorder %s106, 0
      %s109 = sadd.s32 %s108, 1
      %s110 = scalar_select %p107, %s108, %s109
      %p113 = pneg %p107
      %p114 = scmp.eq.s32.totalorder %s16, 1
      %p115 = por %p113, %p114
      %p116 = scmp.ne.s32.totalorder %s108, %s111
      %p117 = scmp.eq.s32.totalorder %s16, 0
      %p118 = por %p116, %p117
      %p119 = scmp.ne.s32.totalorder %s108, %s111
      %p120 = scmp.eq.s32.totalorder %s21, 1
      %p121 = por %p119, %p120
      %p122 = scmp.ne.s32.totalorder %s111, %s112
      %p123 = scmp.eq.s32.totalorder %s21, 0
      %p124 = por %p122, %p123
      %p125 = scmp.ne.s32.totalorder %s111, %s112
      %p126 = scmp.eq.s32.totalorder %s22, 1
      %p127 = por %p125, %p126
      %p129 = scmp.ne.s32.totalorder %s112, %s128
      %p130 = scmp.eq.s32.totalorder %s22, 0
      %p131 = por %p129, %p130
      %p132 = scmp.le.s32.totalorder 1, %s16
      %p133 = scmp.lt.s32.totalorder %s16, 3
      %p134 = pnand %p132, %p133
      %p135 = pneg %p134
      // Predicated region
      $region9: #{tpu_custom_call.1} parent=5 // pred_check
        _
      $region10: #{tpu_custom_call.1} parent=5 // pred_check_branch
        %137 = sbr.rel (%p134) target = $region12
      $region11: #{tpu_custom_call.1} parent=5 // pred_region
        %s138 = ssub.s32 %s16, 1
        // Predicated region
        $region13: #{tpu_custom_call.1} parent=11 // pred_check
          %p139 = pneg %p77
        $region14: #{tpu_custom_call.1} parent=11 // pred_check_branch
          %141 = sbr.rel (%p139) target = $region16
        $region15: #{tpu_custom_call.1} parent=11 // pred_region
          %s143 = ssub.s32 3072, 3072
          %144 = vsyncadd [#allocation6], %s143
          %s145 = sshll.u32 [#allocation5], 4
          %s146 = int_to_ptr.vmem [resolvable:$true] %s145
          %151 = dma.hbm_to_vmem [thread:$0]  %s1, 3072, %s146, [#allocation6], 64, 64, 4
        $region16: #{tpu_custom_call.1} parent=11 // pred_fallthru
          _
        // Predicated region
        $region17: #{tpu_custom_call.1} parent=11 // pred_check
          %p152 = pneg %p98
        $region18: #{tpu_custom_call.1} parent=11 // pred_check_branch
          %154 = sbr.rel (%p152) target = $region20
        $region19: #{tpu_custom_call.1} parent=11 // pred_region
          _
        $region20: #{tpu_custom_call.1} parent=11 // pred_fallthru
          _
      $region12: #{tpu_custom_call.1} parent=5 // pred_fallthru
        _
      %p155 = scmp.lt.s32.totalorder %s16, 2
      // Predicated region
      $region21: #{tpu_custom_call.1} parent=5 // pred_check
        %p156 = pneg %p155
      $region22: #{tpu_custom_call.1} parent=5 // pred_check_branch
        %158 = sbr.rel (%p156) target = $region24
      $region23: #{tpu_custom_call.1} parent=5 // pred_region
        // Predicated region
        $region25: #{tpu_custom_call.1} parent=23 // pred_check
          %p159 = pneg %p50
        $region26: #{tpu_custom_call.1} parent=23 // pred_check_branch
          %161 = sbr.rel (%p159) target = $region28
        $region27: #{tpu_custom_call.1} parent=23 // pred_region
          %s162 = sand.u32 %s40, 1
          %s163 = scalar_lea.sflag [#allocation3], %s162
          %s164 = sand.u32 %s40, 1
          %s165 = smul.addr %s164, 384
          %s166 = scalar_lea.vmem [#allocation2], %s165
          %s167 = smul.u32 32, %s23
          %s168 = smul.u32 3, %s24
          %s170 = ssub.s32 6144, 6144
          %171 = vsyncadd %s163, %s170
          %s172 = smul.addr %s167, 3
          %s173 = sadd.s32 %s168, %s172
          %s174 = smul.addr %s173, 64
          %s175 = scalar_lea.hbm %s0, %s174
          %s176 = sshll.u32 %s166, 4
          %s177 = int_to_ptr.vmem [resolvable:$true] %s176
          %182 = dma.hbm_to_vmem [thread:$0]  %s175, 6144, %s177, %s163, 192, 192, 12
        $region28: #{tpu_custom_call.1} parent=23 // pred_fallthru
          _
      $region24: #{tpu_custom_call.1} parent=5 // pred_fallthru
        _
      %p183 = scmp.le.s32.totalorder 1, %s16
      %p184 = scmp.lt.s32.totalorder %s16, 3
      %p185 = pnand %p183, %p184
      %p186 = pneg %p185
      // Predicated region
      $region29: #{tpu_custom_call.1} parent=5 // pred_check
        _
      $region30: #{tpu_custom_call.1} parent=5 // pred_check_branch
        %188 = sbr.rel (%p185) target = $region32
      $region31: #{tpu_custom_call.1} parent=5 // pred_region
        %s189 = ssub.s32 %s16, 1
        %s190 = sand.u32 %s43, 1
        %s191 = scalar_lea.sflag [#allocation3], %s190
        %s192 = sand.u32 %s43, 1
        %s193 = smul.addr %s192, 384
        %s194 = scalar_lea.vmem [#allocation2], %s193
        // Predicated region
        $region33: #{tpu_custom_call.1} parent=31 // pred_check
          %p195 = pneg %p56
        $region34: #{tpu_custom_call.1} parent=31 // pred_check_branch
          %197 = sbr.rel (%p195) target = $region36
        $region35: #{tpu_custom_call.1} parent=31 // pred_region
          %198 = dma.done %s191, 6144
        $region36: #{tpu_custom_call.1} parent=31 // pred_fallthru
          _
        // Predicated region
        $region37: #{tpu_custom_call.1} parent=31 // pred_check
          %p199 = pneg %p77
        $region38: #{tpu_custom_call.1} parent=31 // pred_check_branch
          %201 = sbr.rel (%p199) target = $region40
        $region39: #{tpu_custom_call.1} parent=31 // pred_region
          %202 = dma.done [#allocation6], 3072
        $region40: #{tpu_custom_call.1} parent=31 // pred_fallthru
          _
        %s203 = sand.u32 %s43, 1
        %s204 = scalar_lea.sflag [#allocation3], %s203
        %s205 = sand.u32 %s43, 1
        %s206 = smul.addr %s205, 384
        %s207 = scalar_lea.vmem [#allocation2], %s206
        %p208 = pneg %p56
        %p209 = pneg %p53
        %p210 = pneg %p77
        %p211 = pneg %p74
        %p212 = pneg %p98
        %p213 = pneg %p95
        %p214 = pneg %p124
        %p215 = pneg %p121
        %s216 = sand.u32 %s111, 1
        %s217 = scalar_lea.sflag [#allocation4], %s216
        %s218 = sand.u32 %s111, 1
        %s219 = smul.addr %s218, 256
        %s220 = scalar_lea.vmem [#allocation7], %s219
        %s221 = smul.u32 32, %s25
        %s222 = smul.u32 3, %s26
        %s223 = smul.u32 32, %s25
        %p225 = scmp.eq.s32.totalorder %s26, 0
        // Predicated region
        $region41: #{tpu_custom_call.1} parent=31 // pred_check
          %p226 = pneg %p225
        $region42: #{tpu_custom_call.1} parent=31 // pred_check_branch
          %228 = sbr.rel (%p226) target = $region44
        $region43: #{tpu_custom_call.1} parent=31 // pred_region
          %229 = vst [vmem:[%s220] sm:$0xff] 0.0
          %230 = vst [vmem:[%s220 + $0x8] sm:$0xff] 0.0
          %231 = vst [vmem:[%s220 + $0x10] sm:$0xff] 0.0
          %232 = vst [vmem:[%s220 + $0x18] sm:$0xff] 0.0
          %233 = vst [vmem:[%s220 + $0x20] sm:$0xff] 0.0
          %234 = vst [vmem:[%s220 + $0x28] sm:$0xff] 0.0
          %235 = vst [vmem:[%s220 + $0x30] sm:$0xff] 0.0
          %236 = vst [vmem:[%s220 + $0x38] sm:$0xff] 0.0
          %237 = vst [vmem:[%s220 + $0x40] sm:$0xff] 0.0
          %238 = vst [vmem:[%s220 + $0x48] sm:$0xff] 0.0
          %239 = vst [vmem:[%s220 + $0x50] sm:$0xff] 0.0
          %240 = vst [vmem:[%s220 + $0x58] sm:$0xff] 0.0
          %241 = vst [vmem:[%s220 + $0x60] sm:$0xff] 0.0
          %242 = vst [vmem:[%s220 + $0x68] sm:$0xff] 0.0
          %243 = vst [vmem:[%s220 + $0x70] sm:$0xff] 0.0
          %244 = vst [vmem:[%s220 + $0x78] sm:$0xff] 0.0
          %245 = vst [vmem:[%s220 + $0x80] sm:$0xff] 0.0
          %246 = vst [vmem:[%s220 + $0x88] sm:$0xff] 0.0
          %247 = vst [vmem:[%s220 + $0x90] sm:$0xff] 0.0
          %248 = vst [vmem:[%s220 + $0x98] sm:$0xff] 0.0
          %249 = vst [vmem:[%s220 + $0xa0] sm:$0xff] 0.0
          %250 = vst [vmem:[%s220 + $0xa8] sm:$0xff] 0.0
          %251 = vst [vmem:[%s220 + $0xb0] sm:$0xff] 0.0
          %252 = vst [vmem:[%s220 + $0xb8] sm:$0xff] 0.0
          %253 = vst [vmem:[%s220 + $0xc0] sm:$0xff] 0.0
          %254 = vst [vmem:[%s220 + $0xc8] sm:$0xff] 0.0
          %255 = vst [vmem:[%s220 + $0xd0] sm:$0xff] 0.0
          %256 = vst [vmem:[%s220 + $0xd8] sm:$0xff] 0.0
          %257 = vst [vmem:[%s220 + $0xe0] sm:$0xff] 0.0
          %258 = vst [vmem:[%s220 + $0xe8] sm:$0xff] 0.0
          %259 = vst [vmem:[%s220 + $0xf0] sm:$0xff] 0.0
          %260 = vst [vmem:[%s220 + $0xf8] sm:$0xff] 0.0
        $region44: #{tpu_custom_call.1} parent=31 // pred_fallthru
          _
        %s261 = smul.u32 %s26, 384
        %s262 = sshra.s32 %s261, 3
        %s263 = sand.u32 %s261, 7
        %s264 = smul.addr %s262, 4
        %s265 = scalar_lea.vmem [#allocation5], %s264
        %v266 = vld [vmem:[%s265] sm:$0xf]
        %v267 = vld [vmem:[%s265 + $0x4] sm:$0xf]
        %v268 = vld [vmem:[%s265 + $0x8] sm:$0xf]
        %v269 = vld [vmem:[%s265 + $0xc] sm:$0xf]
        %v270 = vld [vmem:[%s265 + $0x10] sm:$0xf]
        %v271 = vld [vmem:[%s265 + $0x14] sm:$0xf]
        %v272 = vld [vmem:[%s265 + $0x18] sm:$0xf]
        %v273 = vld [vmem:[%s265 + $0x1c] sm:$0xf]
        %v274 = vld [vmem:[%s265 + $0x20] sm:$0xf]
        %v275 = vld [vmem:[%s265 + $0x24] sm:$0xf]
        %v276 = vld [vmem:[%s265 + $0x28] sm:$0xf]
        %v277 = vld [vmem:[%s265 + $0x2c] sm:$0xf]
        %v278 = vld [vmem:[%s265 + $0x30] sm:$0xf]
        %v279 = vld [vmem:[%s265 + $0x34] sm:$0xf]
        %v280 = vld [vmem:[%s265 + $0x38] sm:$0xf]
        %v281 = vld [vmem:[%s265 + $0x3c] sm:$0xf]
        %v282 = vld [vmem:[%s265 + $0x40] sm:$0xf]
        %v283 = vld [vmem:[%s265 + $0x44] sm:$0xf]
        %v284 = vld [vmem:[%s265 + $0x48] sm:$0xf]
        %v285 = vld [vmem:[%s265 + $0x4c] sm:$0xf]
        %v286 = vld [vmem:[%s265 + $0x50] sm:$0xf]
        %v287 = vld [vmem:[%s265 + $0x54] sm:$0xf]
        %v288 = vld [vmem:[%s265 + $0x58] sm:$0xf]
        %v289 = vld [vmem:[%s265 + $0x5c] sm:$0xf]
        %v290 = vld [vmem:[%s265 + $0x60] sm:$0xf]
        %v291 = vld [vmem:[%s265 + $0x64] sm:$0xf]
        %v292 = vld [vmem:[%s265 + $0x68] sm:$0xf]
        %v293 = vld [vmem:[%s265 + $0x6c] sm:$0xf]
        %v294 = vld [vmem:[%s265 + $0x70] sm:$0xf]
        %v295 = vld [vmem:[%s265 + $0x74] sm:$0xf]
        %v296 = vld [vmem:[%s265 + $0x78] sm:$0xf]
        %v297 = vld [vmem:[%s265 + $0x7c] sm:$0xf]
        %v298 = vld [vmem:[%s265 + $0x80] sm:$0xf]
        %v299 = vld [vmem:[%s265 + $0x84] sm:$0xf]
        %v300 = vld [vmem:[%s265 + $0x88] sm:$0xf]
        %v301 = vld [vmem:[%s265 + $0x8c] sm:$0xf]
        %v302 = vld [vmem:[%s265 + $0x90] sm:$0xf]
        %v303 = vld [vmem:[%s265 + $0x94] sm:$0xf]
        %v304 = vld [vmem:[%s265 + $0x98] sm:$0xf]
        %v305 = vld [vmem:[%s265 + $0x9c] sm:$0xf]
        %v306 = vld [vmem:[%s265 + $0xa0] sm:$0xf]
        %v307 = vld [vmem:[%s265 + $0xa4] sm:$0xf]
        %v308 = vld [vmem:[%s265 + $0xa8] sm:$0xf]
        %v309 = vld [vmem:[%s265 + $0xac] sm:$0xf]
        %v310 = vld [vmem:[%s265 + $0xb0] sm:$0xf]
        %v311 = vld [vmem:[%s265 + $0xb4] sm:$0xf]
        %v312 = vld [vmem:[%s265 + $0xb8] sm:$0xf]
        %v313 = vld [vmem:[%s265 + $0xbc] sm:$0xf]
        %v314 = vld [vmem:[%s220] sm:$0xff]
        %v315 = vld [vmem:[%s220 + $0x8] sm:$0xff]
        %v316 = vld [vmem:[%s220 + $0x10] sm:$0xff]
        %v317 = vld [vmem:[%s220 + $0x18] sm:$0xff]
        %v318 = vld [vmem:[%s220 + $0x20] sm:$0xff]
        %v319 = vld [vmem:[%s220 + $0x28] sm:$0xff]
        %v320 = vld [vmem:[%s220 + $0x30] sm:$0xff]
        %v321 = vld [vmem:[%s220 + $0x38] sm:$0xff]
        %v322 = vld [vmem:[%s220 + $0x40] sm:$0xff]
        %v323 = vld [vmem:[%s220 + $0x48] sm:$0xff]
        %v324 = vld [vmem:[%s220 + $0x50] sm:$0xff]
        %v325 = vld [vmem:[%s220 + $0x58] sm:$0xff]
        %v326 = vld [vmem:[%s220 + $0x60] sm:$0xff]
        %v327 = vld [vmem:[%s220 + $0x68] sm:$0xff]
        %v328 = vld [vmem:[%s220 + $0x70] sm:$0xff]
        %v329 = vld [vmem:[%s220 + $0x78] sm:$0xff]
        %v330 = vld [vmem:[%s220 + $0x80] sm:$0xff]
        %v331 = vld [vmem:[%s220 + $0x88] sm:$0xff]
        %v332 = vld [vmem:[%s220 + $0x90] sm:$0xff]
        %v333 = vld [vmem:[%s220 + $0x98] sm:$0xff]
        %v334 = vld [vmem:[%s220 + $0xa0] sm:$0xff]
        %v335 = vld [vmem:[%s220 + $0xa8] sm:$0xff]
        %v336 = vld [vmem:[%s220 + $0xb0] sm:$0xff]
        %v337 = vld [vmem:[%s220 + $0xb8] sm:$0xff]
        %v338 = vld [vmem:[%s220 + $0xc0] sm:$0xff]
        %v339 = vld [vmem:[%s220 + $0xc8] sm:$0xff]
        %v340 = vld [vmem:[%s220 + $0xd0] sm:$0xff]
        %v341 = vld [vmem:[%s220 + $0xd8] sm:$0xff]
        %v342 = vld [vmem:[%s220 + $0xe0] sm:$0xff]
        %v343 = vld [vmem:[%s220 + $0xe8] sm:$0xff]
        %v344 = vld [vmem:[%s220 + $0xf0] sm:$0xff]
        %v345 = vld [vmem:[%s220 + $0xf8] sm:$0xff]
        %v346 = vld [vmem:[%s194] sm:$0xff]
        %v347 = vld [vmem:[%s194 + $0x8] sm:$0xf]
        %v348 = vld [vmem:[%s194 + $0xc] sm:$0xff]
        %v349 = vld [vmem:[%s194 + $0x14] sm:$0xf]
        %v350 = vld [vmem:[%s194 + $0x18] sm:$0xff]
        %v351 = vld [vmem:[%s194 + $0x20] sm:$0xf]
        %v352 = vld [vmem:[%s194 + $0x24] sm:$0xff]
        %v353 = vld [vmem:[%s194 + $0x2c] sm:$0xf]
        %v354 = vld [vmem:[%s194 + $0x30] sm:$0xff]
        %v355 = vld [vmem:[%s194 + $0x38] sm:$0xf]
        %v356 = vld [vmem:[%s194 + $0x3c] sm:$0xff]
        %v357 = vld [vmem:[%s194 + $0x44] sm:$0xf]
        %v358 = vld [vmem:[%s194 + $0x48] sm:$0xff]
        %v359 = vld [vmem:[%s194 + $0x50] sm:$0xf]
        %v360 = vld [vmem:[%s194 + $0x54] sm:$0xff]
        %v361 = vld [vmem:[%s194 + $0x5c] sm:$0xf]
        %v362 = vld [vmem:[%s194 + $0x60] sm:$0xff]
        %v363 = vld [vmem:[%s194 + $0x68] sm:$0xf]
        %v364 = vld [vmem:[%s194 + $0x6c] sm:$0xff]
        %v365 = vld [vmem:[%s194 + $0x74] sm:$0xf]
        %v366 = vld [vmem:[%s194 + $0x78] sm:$0xff]
        %v367 = vld [vmem:[%s194 + $0x80] sm:$0xf]
        %v368 = vld [vmem:[%s194 + $0x84] sm:$0xff]
        %v369 = vld [vmem:[%s194 + $0x8c] sm:$0xf]
        %v370 = vld [vmem:[%s194 + $0x90] sm:$0xff]
        %v371 = vld [vmem:[%s194 + $0x98] sm:$0xf]
        %v372 = vld [vmem:[%s194 + $0x9c] sm:$0xff]
        %v373 = vld [vmem:[%s194 + $0xa4] sm:$0xf]
        %v374 = vld [vmem:[%s194 + $0xa8] sm:$0xff]
        %v375 = vld [vmem:[%s194 + $0xb0] sm:$0xf]
        %v376 = vld [vmem:[%s194 + $0xb4] sm:$0xff]
        %v377 = vld [vmem:[%s194 + $0xbc] sm:$0xf]
        %v378 = vld [vmem:[%s194 + $0xc0] sm:$0xff]
        %v379 = vld [vmem:[%s194 + $0xc8] sm:$0xf]
        %v380 = vld [vmem:[%s194 + $0xcc] sm:$0xff]
        %v381 = vld [vmem:[%s194 + $0xd4] sm:$0xf]
        %v382 = vld [vmem:[%s194 + $0xd8] sm:$0xff]
        %v383 = vld [vmem:[%s194 + $0xe0] sm:$0xf]
        %v384 = vld [vmem:[%s194 + $0xe4] sm:$0xff]
        %v385 = vld [vmem:[%s194 + $0xec] sm:$0xf]
        %v386 = vld [vmem:[%s194 + $0xf0] sm:$0xff]
        %v387 = vld [vmem:[%s194 + $0xf8] sm:$0xf]
        %v388 = vld [vmem:[%s194 + $0xfc] sm:$0xff]
        %v389 = vld [vmem:[%s194 + $0x104] sm:$0xf]
        %v390 = vld [vmem:[%s194 + $0x108] sm:$0xff]
        %v391 = vld [vmem:[%s194 + $0x110] sm:$0xf]
        %v392 = vld [vmem:[%s194 + $0x114] sm:$0xff]
        %v393 = vld [vmem:[%s194 + $0x11c] sm:$0xf]
        %v394 = vld [vmem:[%s194 + $0x120] sm:$0xff]
        %v395 = vld [vmem:[%s194 + $0x128] sm:$0xf]
        %v396 = vld [vmem:[%s194 + $0x12c] sm:$0xff]
        %v397 = vld [vmem:[%s194 + $0x134] sm:$0xf]
        %v398 = vld [vmem:[%s194 + $0x138] sm:$0xff]
        %v399 = vld [vmem:[%s194 + $0x140] sm:$0xf]
        %v400 = vld [vmem:[%s194 + $0x144] sm:$0xff]
        %v401 = vld [vmem:[%s194 + $0x14c] sm:$0xf]
        %v402 = vld [vmem:[%s194 + $0x150] sm:$0xff]
        %v403 = vld [vmem:[%s194 + $0x158] sm:$0xf]
        %v404 = vld [vmem:[%s194 + $0x15c] sm:$0xff]
        %v405 = vld [vmem:[%s194 + $0x164] sm:$0xf]
        %v406 = vld [vmem:[%s194 + $0x168] sm:$0xff]
        %v407 = vld [vmem:[%s194 + $0x170] sm:$0xf]
        %v408 = vld [vmem:[%s194 + $0x174] sm:$0xff]
        %v409 = vld [vmem:[%s194 + $0x17c] sm:$0xf]
        %v474 = vunpack.c.l.b16 %v346
        %v475 = vunpack.c.h.b16 %v346
        %v476 = vunpack.c.l.b16 %v347
        %v477 = vunpack.c.l.b16 %v348
        %v478 = vunpack.c.h.b16 %v348
        %v479 = vunpack.c.l.b16 %v349
        %v480 = vunpack.c.l.b16 %v350
        %v481 = vunpack.c.h.b16 %v350
        %v482 = vunpack.c.l.b16 %v351
        %v483 = vunpack.c.l.b16 %v352
        %v484 = vunpack.c.h.b16 %v352
        %v485 = vunpack.c.l.b16 %v353
        %v486 = vunpack.c.l.b16 %v354
        %v487 = vunpack.c.h.b16 %v354
        %v488 = vunpack.c.l.b16 %v355
        %v489 = vunpack.c.l.b16 %v356
        %v490 = vunpack.c.h.b16 %v356
        %v491 = vunpack.c.l.b16 %v357
        %v492 = vunpack.c.l.b16 %v358
        %v493 = vunpack.c.h.b16 %v358
        %v494 = vunpack.c.l.b16 %v359
        %v495 = vunpack.c.l.b16 %v360
        %v496 = vunpack.c.h.b16 %v360
        %v497 = vunpack.c.l.b16 %v361
        %v498 = vunpack.c.l.b16 %v362
        %v499 = vunpack.c.h.b16 %v362
        %v500 = vunpack.c.l.b16 %v363
        %v501 = vunpack.c.l.b16 %v364
        %v502 = vunpack.c.h.b16 %v364
        %v503 = vunpack.c.l.b16 %v365
        %v504 = vunpack.c.l.b16 %v366
        %v505 = vunpack.c.h.b16 %v366
        %v506 = vunpack.c.l.b16 %v367
        %v507 = vunpack.c.l.b16 %v368
        %v508 = vunpack.c.h.b16 %v368
        %v509 = vunpack.c.l.b16 %v369
        %v510 = vunpack.c.l.b16 %v370
        %v511 = vunpack.c.h.b16 %v370
        %v512 = vunpack.c.l.b16 %v371
        %v513 = vunpack.c.l.b16 %v372
        %v514 = vunpack.c.h.b16 %v372
        %v515 = vunpack.c.l.b16 %v373
        %v516 = vunpack.c.l.b16 %v374
        %v517 = vunpack.c.h.b16 %v374
        %v518 = vunpack.c.l.b16 %v375
        %v519 = vunpack.c.l.b16 %v376
        %v520 = vunpack.c.h.b16 %v376
        %v521 = vunpack.c.l.b16 %v377
        %v522 = vunpack.c.l.b16 %v378
        %v523 = vunpack.c.h.b16 %v378
        %v524 = vunpack.c.l.b16 %v379
        %v525 = vunpack.c.l.b16 %v380
        %v526 = vunpack.c.h.b16 %v380
        %v527 = vunpack.c.l.b16 %v381
        %v528 = vunpack.c.l.b16 %v382
        %v529 = vunpack.c.h.b16 %v382
        %v530 = vunpack.c.l.b16 %v383
        %v531 = vunpack.c.l.b16 %v384
        %v532 = vunpack.c.h.b16 %v384
        %v533 = vunpack.c.l.b16 %v385
        %v534 = vunpack.c.l.b16 %v386
        %v535 = vunpack.c.h.b16 %v386
        %v536 = vunpack.c.l.b16 %v387
        %v537 = vunpack.c.l.b16 %v388
        %v538 = vunpack.c.h.b16 %v388
        %v539 = vunpack.c.l.b16 %v389
        %v540 = vunpack.c.l.b16 %v390
        %v541 = vunpack.c.h.b16 %v390
        %v542 = vunpack.c.l.b16 %v391
        %v543 = vunpack.c.l.b16 %v392
        %v544 = vunpack.c.h.b16 %v392
        %v545 = vunpack.c.l.b16 %v393
        %v546 = vunpack.c.l.b16 %v394
        %v547 = vunpack.c.h.b16 %v394
        %v548 = vunpack.c.l.b16 %v395
        %v549 = vunpack.c.l.b16 %v396
        %v550 = vunpack.c.h.b16 %v396
        %v551 = vunpack.c.l.b16 %v397
        %v552 = vunpack.c.l.b16 %v398
        %v553 = vunpack.c.h.b16 %v398
        %v554 = vunpack.c.l.b16 %v399
        %v555 = vunpack.c.l.b16 %v400
        %v556 = vunpack.c.h.b16 %v400
        %v557 = vunpack.c.l.b16 %v401
        %v558 = vunpack.c.l.b16 %v402
        %v559 = vunpack.c.h.b16 %v402
        %v560 = vunpack.c.l.b16 %v403
        %v561 = vunpack.c.l.b16 %v404
        %v562 = vunpack.c.h.b16 %v404
        %v563 = vunpack.c.l.b16 %v405
        %v564 = vunpack.c.l.b16 %v406
        %v565 = vunpack.c.h.b16 %v406
        %v566 = vunpack.c.l.b16 %v407
        %v567 = vunpack.c.l.b16 %v408
        %v568 = vunpack.c.h.b16 %v408
        %v569 = vunpack.c.l.b16 %v409
        %v570 = vpack.c.b16 %v477, %v474
        %v571 = vpack.c.b16 %v478, %v475
        %v572 = vpack.c.b16 %v479, %v476
        %v573 = vpack.c.b16 %v483, %v480
        %v574 = vpack.c.b16 %v484, %v481
        %v575 = vpack.c.b16 %v485, %v482
        %v576 = vpack.c.b16 %v489, %v486
        %v577 = vpack.c.b16 %v490, %v487
        %v578 = vpack.c.b16 %v491, %v488
        %v579 = vpack.c.b16 %v495, %v492
        %v580 = vpack.c.b16 %v496, %v493
        %v581 = vpack.c.b16 %v497, %v494
        %v582 = vpack.c.b16 %v501, %v498
        %v583 = vpack.c.b16 %v502, %v499
        %v584 = vpack.c.b16 %v503, %v500
        %v585 = vpack.c.b16 %v507, %v504
        %v586 = vpack.c.b16 %v508, %v505
        %v587 = vpack.c.b16 %v509, %v506
        %v588 = vpack.c.b16 %v513, %v510
        %v589 = vpack.c.b16 %v514, %v511
        %v590 = vpack.c.b16 %v515, %v512
        %v591 = vpack.c.b16 %v519, %v516
        %v592 = vpack.c.b16 %v520, %v517
        %v593 = vpack.c.b16 %v521, %v518
        %v594 = vpack.c.b16 %v525, %v522
        %v595 = vpack.c.b16 %v526, %v523
        %v596 = vpack.c.b16 %v527, %v524
        %v597 = vpack.c.b16 %v531, %v528
        %v598 = vpack.c.b16 %v532, %v529
        %v599 = vpack.c.b16 %v533, %v530
        %v600 = vpack.c.b16 %v537, %v534
        %v601 = vpack.c.b16 %v538, %v535
        %v602 = vpack.c.b16 %v539, %v536
        %v603 = vpack.c.b16 %v543, %v540
        %v604 = vpack.c.b16 %v544, %v541
        %v605 = vpack.c.b16 %v545, %v542
        %v606 = vpack.c.b16 %v549, %v546
        %v607 = vpack.c.b16 %v550, %v547
        %v608 = vpack.c.b16 %v551, %v548
        %v609 = vpack.c.b16 %v555, %v552
        %v610 = vpack.c.b16 %v556, %v553
        %v611 = vpack.c.b16 %v557, %v554
        %v612 = vpack.c.b16 %v561, %v558
        %v613 = vpack.c.b16 %v562, %v559
        %v614 = vpack.c.b16 %v563, %v560
        %v615 = vpack.c.b16 %v567, %v564
        %v616 = vpack.c.b16 %v568, %v565
        %v617 = vpack.c.b16 %v569, %v566
        %v714 = vunpack.c.l.b16 %v266
        %v715 = vunpack.c.l.b16 %v267
        %v716 = vunpack.c.l.b16 %v268
        %v717 = vunpack.c.l.b16 %v269
        %v718 = vunpack.c.l.b16 %v270
        %v719 = vunpack.c.l.b16 %v271
        %v720 = vunpack.c.l.b16 %v272
        %v721 = vunpack.c.l.b16 %v273
        %v722 = vunpack.c.l.b16 %v274
        %v723 = vunpack.c.l.b16 %v275
        %v724 = vunpack.c.l.b16 %v276
        %v725 = vunpack.c.l.b16 %v277
        %v726 = vunpack.c.l.b16 %v278
        %v727 = vunpack.c.l.b16 %v279
        %v728 = vunpack.c.l.b16 %v280
        %v729 = vunpack.c.l.b16 %v281
        %v730 = vunpack.c.l.b16 %v282
        %v731 = vunpack.c.l.b16 %v283
        %v732 = vunpack.c.l.b16 %v284
        %v733 = vunpack.c.l.b16 %v285
        %v734 = vunpack.c.l.b16 %v286
        %v735 = vunpack.c.l.b16 %v287
        %v736 = vunpack.c.l.b16 %v288
        %v737 = vunpack.c.l.b16 %v289
        %v738 = vunpack.c.l.b16 %v290
        %v739 = vunpack.c.l.b16 %v291
        %v740 = vunpack.c.l.b16 %v292
        %v741 = vunpack.c.l.b16 %v293
        %v742 = vunpack.c.l.b16 %v294
        %v743 = vunpack.c.l.b16 %v295
        %v744 = vunpack.c.l.b16 %v296
        %v745 = vunpack.c.l.b16 %v297
        %v746 = vunpack.c.l.b16 %v298
        %v747 = vunpack.c.l.b16 %v299
        %v748 = vunpack.c.l.b16 %v300
        %v749 = vunpack.c.l.b16 %v301
        %v750 = vunpack.c.l.b16 %v302
        %v751 = vunpack.c.l.b16 %v303
        %v752 = vunpack.c.l.b16 %v304
        %v753 = vunpack.c.l.b16 %v305
        %v754 = vunpack.c.l.b16 %v306
        %v755 = vunpack.c.l.b16 %v307
        %v756 = vunpack.c.l.b16 %v308
        %v757 = vunpack.c.l.b16 %v309
        %v758 = vunpack.c.l.b16 %v310
        %v759 = vunpack.c.l.b16 %v311
        %v760 = vunpack.c.l.b16 %v312
        %v761 = vunpack.c.l.b16 %v313
        %v762 = vpack.c.b16 %v715, %v714
        %v763 = vpack.c.b16 %v717, %v716
        %v764 = vpack.c.b16 %v719, %v718
        %v765 = vpack.c.b16 %v721, %v720
        %v766 = vpack.c.b16 %v723, %v722
        %v767 = vpack.c.b16 %v725, %v724
        %v768 = vpack.c.b16 %v727, %v726
        %v769 = vpack.c.b16 %v729, %v728
        %v770 = vpack.c.b16 %v731, %v730
        %v771 = vpack.c.b16 %v733, %v732
        %v772 = vpack.c.b16 %v735, %v734
        %v773 = vpack.c.b16 %v737, %v736
        %v774 = vpack.c.b16 %v739, %v738
        %v775 = vpack.c.b16 %v741, %v740
        %v776 = vpack.c.b16 %v743, %v742
        %v777 = vpack.c.b16 %v745, %v744
        %v778 = vpack.c.b16 %v747, %v746
        %v779 = vpack.c.b16 %v749, %v748
        %v780 = vpack.c.b16 %v751, %v750
        %v781 = vpack.c.b16 %v753, %v752
        %v782 = vpack.c.b16 %v755, %v754
        %v783 = vpack.c.b16 %v757, %v756
        %v784 = vpack.c.b16 %v759, %v758
        %v785 = vpack.c.b16 %v761, %v760
        %810 = vmatprep.subr.bf16.mxu0 0
        %811 = vmatpush1.bf16.msra.mxu0 %v762
        %812 = vmatprep.subr.bf16.mxu0 0
        %813 = vmatpush1.bf16.msra.mxu0 %v763
        %814 = vmatprep.subr.bf16.mxu0 0
        %815 = vmatpush1.bf16.msra.mxu0 %v764
        %816 = vmatprep.subr.bf16.mxu0 0
        %817 = vmatpush1.bf16.msra.mxu0 %v765
        %818 = vmatprep.subr.bf16.mxu0 0
        %819 = vmatpush1.bf16.msra.mxu0 %v766
        %820 = vmatprep.subr.bf16.mxu0 0
        %821 = vmatpush1.bf16.msra.mxu0 %v767
        %822 = vmatprep.subr.bf16.mxu0 0
        %823 = vmatpush1.bf16.msra.mxu0 %v768
        %824 = vmatprep.subr.bf16.mxu0 0
        %825 = vmatpush1.bf16.msra.mxu0 %v769
        %826 = vmatprep.subr.bf16.mxu0 0
        %827 = vmatpush1.bf16.msra.mxu0 %v770
        %828 = vmatprep.subr.bf16.mxu0 0
        %829 = vmatpush1.bf16.msra.mxu0 %v771
        %830 = vmatprep.subr.bf16.mxu0 0
        %831 = vmatpush1.bf16.msra.mxu0 %v772
        %832 = vmatprep.subr.bf16.mxu0 0
        %833 = vmatpush1.bf16.msra.mxu0 %v773
        %834 = vmatprep.subr.bf16.mxu0 0
        %835 = vmatpush1.bf16.msra.mxu0 %v774
        %836 = vmatprep.subr.bf16.mxu0 0
        %837 = vmatpush1.bf16.msra.mxu0 %v775
        %838 = vmatprep.subr.bf16.mxu0 0
        %839 = vmatpush1.bf16.msra.mxu0 %v776
        %840 = vmatprep.subr.bf16.mxu0 0
        %841 = vmatpush1.bf16.msra.mxu0 %v777
        %842 = vmatprep.mubr.bf16.mxu0 %v571
        %843 = vmatmul.mubr.bf16.gmra.mrb[0].mxu0 %v570
        %v844 = vpop.f32.mrb[0].mxu0
        %v845 = vadd.f32 0.0, %v844
        %v846 = vpop.f32.mrb[0].mxu0
        %v847 = vpop.f32.mrb[0].mxu0
        %v848 = vadd.f32 0.0, %v847
        %v849 = vpop.f32.mrb[0].mxu0
        %850 = vmatprep.mubr.bf16.mxu0 %v574
        %851 = vmatmul.mubr.bf16.gmra.mrb[0].mxu0 %v573
        %v852 = vpop.f32.mrb[0].mxu0
        %v853 = vadd.f32 0.0, %v852
        %v854 = vpop.f32.mrb[0].mxu0
        %v855 = vpop.f32.mrb[0].mxu0
        %v856 = vadd.f32 0.0, %v855
        %v857 = vpop.f32.mrb[0].mxu0
        %858 = vmatprep.mubr.bf16.mxu0 %v577
        %859 = vmatmul.mubr.bf16.gmra.mrb[0].mxu0 %v576
        %v860 = vpop.f32.mrb[0].mxu0
        %v861 = vadd.f32 0.0, %v860
        %v862 = vpop.f32.mrb[0].mxu0
        %v863 = vpop.f32.mrb[0].mxu0
        %v864 = vadd.f32 0.0, %v863
        %v865 = vpop.f32.mrb[0].mxu0
        %866 = vmatprep.mubr.bf16.mxu0 %v580
        %867 = vmatmul.mubr.bf16.gmra.mrb[0].mxu0 %v579
        %v868 = vpop.f32.mrb[0].mxu0
        %v869 = vadd.f32 0.0, %v868
        %v870 = vpop.f32.mrb[0].mxu0
        %v871 = vpop.f32.mrb[0].mxu0
        %v872 = vadd.f32 0.0, %v871
        %v873 = vpop.f32.mrb[0].mxu0
        %874 = vmatprep.mubr.bf16.mxu0 %v583
        %875 = vmatmul.mubr.bf16.gmra.mrb[0].mxu0 %v582
        %v876 = vpop.f32.mrb[0].mxu0
        %v877 = vadd.f32 0.0, %v876
        %v878 = vpop.f32.mrb[0].mxu0
        %v879 = vpop.f32.mrb[0].mxu0
        %v880 = vadd.f32 0.0, %v879
        %v881 = vpop.f32.mrb[0].mxu0
        %882 = vmatprep.mubr.bf16.mxu0 %v586
        %883 = vmatmul.mubr.bf16.gmra.mrb[0].mxu0 %v585
        %v884 = vpop.f32.mrb[0].mxu0
        %v885 = vadd.f32 0.0, %v884
        %v886 = vpop.f32.mrb[0].mxu0
        %v887 = vpop.f32.mrb[0].mxu0
        %v888 = vadd.f32 0.0, %v887
        %v889 = vpop.f32.mrb[0].mxu0
        %890 = vmatprep.mubr.bf16.mxu0 %v589
        %891 = vmatmul.mubr.bf16.gmra.mrb[0].mxu0 %v588
        %v892 = vpop.f32.mrb[0].mxu0
        %v893 = vadd.f32 0.0, %v892
        %v894 = vpop.f32.mrb[0].mxu0
        %v895 = vpop.f32.mrb[0].mxu0
        %v896 = vadd.f32 0.0, %v895
        %v897 = vpop.f32.mrb[0].mxu0
        %898 = vmatprep.mubr.bf16.mxu0 %v592
        %899 = vmatmul.mubr.bf16.gmra.mrb[0].mxu0 %v591
        %v900 = vpop.f32.mrb[0].mxu0
        %v901 = vadd.f32 0.0, %v900
        %v902 = vpop.f32.mrb[0].mxu0
        %v903 = vpop.f32.mrb[0].mxu0
        %v904 = vadd.f32 0.0, %v903
        %v905 = vpop.f32.mrb[0].mxu0
        %906 = vmatprep.mubr.bf16.mxu0 %v595
        %907 = vmatmul.mubr.bf16.gmra.mrb[0].mxu0 %v594
        %v908 = vpop.f32.mrb[0].mxu0
        %v909 = vadd.f32 0.0, %v908
        %v910 = vpop.f32.mrb[0].mxu0
        %v911 = vpop.f32.mrb[0].mxu0
        %v912 = vadd.f32 0.0, %v911
        %v913 = vpop.f32.mrb[0].mxu0
        %914 = vmatprep.mubr.bf16.mxu0 %v598
        %915 = vmatmul.mubr.bf16.gmra.mrb[0].mxu0 %v597
        %v916 = vpop.f32.mrb[0].mxu0
        %v917 = vadd.f32 0.0, %v916
        %v918 = vpop.f32.mrb[0].mxu0
        %v919 = vpop.f32.mrb[0].mxu0
        %v920 = vadd.f32 0.0, %v919
        %v921 = vpop.f32.mrb[0].mxu0
        %922 = vmatprep.mubr.bf16.mxu0 %v601
        %923 = vmatmul.mubr.bf16.gmra.mrb[0].mxu0 %v600
        %v924 = vpop.f32.mrb[0].mxu0
        %v925 = vadd.f32 0.0, %v924
        %v926 = vpop.f32.mrb[0].mxu0
        %v927 = vpop.f32.mrb[0].mxu0
        %v928 = vadd.f32 0.0, %v927
        %v929 = vpop.f32.mrb[0].mxu0
        %930 = vmatprep.mubr.bf16.mxu0 %v604
        %931 = vmatmul.mubr.bf16.gmra.mrb[0].mxu0 %v603
        %v932 = vpop.f32.mrb[0].mxu0
        %v933 = vadd.f32 0.0, %v932
        %v934 = vpop.f32.mrb[0].mxu0
        %v935 = vpop.f32.mrb[0].mxu0
        %v936 = vadd.f32 0.0, %v935
        %v937 = vpop.f32.mrb[0].mxu0
        %938 = vmatprep.mubr.bf16.mxu0 %v607
        %939 = vmatmul.mubr.bf16.gmra.mrb[0].mxu0 %v606
        %v940 = vpop.f32.mrb[0].mxu0
        %v941 = vadd.f32 0.0, %v940
        %v942 = vpop.f32.mrb[0].mxu0
        %v943 = vpop.f32.mrb[0].mxu0
        %v944 = vadd.f32 0.0, %v943
        %v945 = vpop.f32.mrb[0].mxu0
        %946 = vmatprep.mubr.bf16.mxu0 %v610
        %947 = vmatmul.mubr.bf16.gmra.mrb[0].mxu0 %v609
        %v948 = vpop.f32.mrb[0].mxu0
        %v949 = vadd.f32 0.0, %v948
        %v950 = vpop.f32.mrb[0].mxu0
        %v951 = vpop.f32.mrb[0].mxu0
        %v952 = vadd.f32 0.0, %v951
        %v953 = vpop.f32.mrb[0].mxu0
        %954 = vmatprep.mubr.bf16.mxu0 %v613
        %955 = vmatmul.mubr.bf16.gmra.mrb[0].mxu0 %v612
        %v956 = vpop.f32.mrb[0].mxu0
        %v957 = vadd.f32 0.0, %v956
        %v958 = vpop.f32.mrb[0].mxu0
        %v959 = vpop.f32.mrb[0].mxu0
        %v960 = vadd.f32 0.0, %v959
        %v961 = vpop.f32.mrb[0].mxu0
        %962 = vmatprep.mubr.bf16.mxu0 %v616
        %963 = vmatmul.mubr.bf16.gmra.mrb[0].mxu0 %v615
        %v964 = vpop.f32.mrb[0].mxu0
        %v965 = vadd.f32 0.0, %v964
        %v966 = vpop.f32.mrb[0].mxu0
        %v967 = vpop.f32.mrb[0].mxu0
        %v968 = vadd.f32 0.0, %v967
        %v969 = vpop.f32.mrb[0].mxu0
        %970 = vdwg.mxu0
        %971 = vmatprep.subr.bf16.mxu0 0
        %972 = vmatpush1.bf16.msra.mxu0 %v778
        %973 = vmatprep.subr.bf16.mxu0 0
        %974 = vmatpush1.bf16.msra.mxu0 %v779
        %975 = vmatprep.subr.bf16.mxu0 0
        %976 = vmatpush1.bf16.msra.mxu0 %v780
        %977 = vmatprep.subr.bf16.mxu0 0
        %978 = vmatpush1.bf16.msra.mxu0 %v781
        %979 = vmatprep.subr.bf16.mxu0 0
        %980 = vmatpush1.bf16.msra.mxu0 %v782
        %981 = vmatprep.subr.bf16.mxu0 0
        %982 = vmatpush1.bf16.msra.mxu0 %v783
        %983 = vmatprep.subr.bf16.mxu0 0
        %984 = vmatpush1.bf16.msra.mxu0 %v784
        %985 = vmatprep.subr.bf16.mxu0 0
        %986 = vmatpush1.bf16.msra.mxu0 %v785
        %987 = vmatprep.subr.bf16.mxu0 0
        %988 = vmatpush1.bf16.msra.mxu0 0
        %989 = vmatprep.subr.bf16.mxu0 0
        %990 = vmatpush1.bf16.msra.mxu0 0
        %991 = vmatprep.subr.bf16.mxu0 0
        %992 = vmatpush1.bf16.msra.mxu0 0
        %993 = vmatprep.subr.bf16.mxu0 0
        %994 = vmatpush1.bf16.msra.mxu0 0
        %995 = vmatprep.subr.bf16.mxu0 0
        %996 = vmatpush1.bf16.msra.mxu0 0
        %997 = vmatprep.subr.bf16.mxu0 0
        %998 = vmatpush1.bf16.msra.mxu0 0
        %999 = vmatprep.subr.bf16.mxu0 0
        %1000 = vmatpush1.bf16.msra.mxu0 0
        %1001 = vmatprep.subr.bf16.mxu0 0
        %1002 = vmatpush1.bf16.msra.mxu0 0
        %1003 = vmatprep.mubr.bf16.mxu0 0
        %1004 = vmatmul.mubr.bf16.gmra.mrb[0].mxu0 %v572
        %v1005 = vpop.f32.mrb[0].mxu0
        %v1006 = vadd.f32 %v845, %v1005
        %v1007 = vpop.f32.mrb[0].mxu0
        %v1008 = vpop.f32.mrb[0].mxu0
        %v1009 = vadd.f32 %v848, %v1008
        %v1010 = vpop.f32.mrb[0].mxu0
        %1011 = vmatprep.mubr.bf16.mxu0 0
        %1012 = vmatmul.mubr.bf16.gmra.mrb[0].mxu0 %v575
        %v1013 = vpop.f32.mrb[0].mxu0
        %v1014 = vadd.f32 %v853, %v1013
        %v1015 = vpop.f32.mrb[0].mxu0
        %v1016 = vpop.f32.mrb[0].mxu0
        %v1017 = vadd.f32 %v856, %v1016
        %v1018 = vpop.f32.mrb[0].mxu0
        %1019 = vmatprep.mubr.bf16.mxu0 0
        %1020 = vmatmul.mubr.bf16.gmra.mrb[0].mxu0 %v578
        %v1021 = vpop.f32.mrb[0].mxu0
        %v1022 = vadd.f32 %v861, %v1021
        %v1023 = vpop.f32.mrb[0].mxu0
        %v1024 = vpop.f32.mrb[0].mxu0
        %v1025 = vadd.f32 %v864, %v1024
        %v1026 = vpop.f32.mrb[0].mxu0
        %1027 = vmatprep.mubr.bf16.mxu0 0
        %1028 = vmatmul.mubr.bf16.gmra.mrb[0].mxu0 %v581
        %v1029 = vpop.f32.mrb[0].mxu0
        %v1030 = vadd.f32 %v869, %v1029
        %v1031 = vpop.f32.mrb[0].mxu0
        %v1032 = vpop.f32.mrb[0].mxu0
        %v1033 = vadd.f32 %v872, %v1032
        %v1034 = vpop.f32.mrb[0].mxu0
        %1035 = vmatprep.mubr.bf16.mxu0 0
        %1036 = vmatmul.mubr.bf16.gmra.mrb[0].mxu0 %v584
        %v1037 = vpop.f32.mrb[0].mxu0
        %v1038 = vadd.f32 %v877, %v1037
        %v1039 = vpop.f32.mrb[0].mxu0
        %v1040 = vpop.f32.mrb[0].mxu0
        %v1041 = vadd.f32 %v880, %v1040
        %v1042 = vpop.f32.mrb[0].mxu0
        %1043 = vmatprep.mubr.bf16.mxu0 0
        %1044 = vmatmul.mubr.bf16.gmra.mrb[0].mxu0 %v587
        %v1045 = vpop.f32.mrb[0].mxu0
        %v1046 = vadd.f32 %v885, %v1045
        %v1047 = vpop.f32.mrb[0].mxu0
        %v1048 = vpop.f32.mrb[0].mxu0
        %v1049 = vadd.f32 %v888, %v1048
        %v1050 = vpop.f32.mrb[0].mxu0
        %1051 = vmatprep.mubr.bf16.mxu0 0
        %1052 = vmatmul.mubr.bf16.gmra.mrb[0].mxu0 %v590
        %v1053 = vpop.f32.mrb[0].mxu0
        %v1054 = vadd.f32 %v893, %v1053
        %v1055 = vpop.f32.mrb[0].mxu0
        %v1056 = vpop.f32.mrb[0].mxu0
        %v1057 = vadd.f32 %v896, %v1056
        %v1058 = vpop.f32.mrb[0].mxu0
        %1059 = vmatprep.mubr.bf16.mxu0 0
        %1060 = vmatmul.mubr.bf16.gmra.mrb[0].mxu0 %v593
        %v1061 = vpop.f32.mrb[0].mxu0
        %v1062 = vadd.f32 %v901, %v1061
        %v1063 = vpop.f32.mrb[0].mxu0
        %v1064 = vpop.f32.mrb[0].mxu0
        %v1065 = vadd.f32 %v904, %v1064
        %v1066 = vpop.f32.mrb[0].mxu0
        %1067 = vmatprep.mubr.bf16.mxu0 0
        %1068 = vmatmul.mubr.bf16.gmra.mrb[0].mxu0 %v596
        %v1069 = vpop.f32.mrb[0].mxu0
        %v1070 = vadd.f32 %v909, %v1069
        %v1071 = vpop.f32.mrb[0].mxu0
        %v1072 = vpop.f32.mrb[0].mxu0
        %v1073 = vadd.f32 %v912, %v1072
        %v1074 = vpop.f32.mrb[0].mxu0
        %1075 = vmatprep.mubr.bf16.mxu0 0
        %1076 = vmatmul.mubr.bf16.gmra.mrb[0].mxu0 %v599
        %v1077 = vpop.f32.mrb[0].mxu0
        %v1078 = vadd.f32 %v917, %v1077
        %v1079 = vpop.f32.mrb[0].mxu0
        %v1080 = vpop.f32.mrb[0].mxu0
        %v1081 = vadd.f32 %v920, %v1080
        %v1082 = vpop.f32.mrb[0].mxu0
        %1083 = vmatprep.mubr.bf16.mxu0 0
        %1084 = vmatmul.mubr.bf16.gmra.mrb[0].mxu0 %v602
        %v1085 = vpop.f32.mrb[0].mxu0
        %v1086 = vadd.f32 %v925, %v1085
        %v1087 = vpop.f32.mrb[0].mxu0
        %v1088 = vpop.f32.mrb[0].mxu0
        %v1089 = vadd.f32 %v928, %v1088
        %v1090 = vpop.f32.mrb[0].mxu0
        %1091 = vmatprep.mubr.bf16.mxu0 0
        %1092 = vmatmul.mubr.bf16.gmra.mrb[0].mxu0 %v605
        %v1093 = vpop.f32.mrb[0].mxu0
        %v1094 = vadd.f32 %v933, %v1093
        %v1095 = vpop.f32.mrb[0].mxu0
        %v1096 = vpop.f32.mrb[0].mxu0
        %v1097 = vadd.f32 %v936, %v1096
        %v1098 = vpop.f32.mrb[0].mxu0
        %1099 = vmatprep.mubr.bf16.mxu0 0
        %1100 = vmatmul.mubr.bf16.gmra.mrb[0].mxu0 %v608
        %v1101 = vpop.f32.mrb[0].mxu0
        %v1102 = vadd.f32 %v941, %v1101
        %v1103 = vpop.f32.mrb[0].mxu0
        %v1104 = vpop.f32.mrb[0].mxu0
        %v1105 = vadd.f32 %v944, %v1104
        %v1106 = vpop.f32.mrb[0].mxu0
        %1107 = vmatprep.mubr.bf16.mxu0 0
        %1108 = vmatmul.mubr.bf16.gmra.mrb[0].mxu0 %v611
        %v1109 = vpop.f32.mrb[0].mxu0
        %v1110 = vadd.f32 %v949, %v1109
        %v1111 = vpop.f32.mrb[0].mxu0
        %v1112 = vpop.f32.mrb[0].mxu0
        %v1113 = vadd.f32 %v952, %v1112
        %v1114 = vpop.f32.mrb[0].mxu0
        %1115 = vmatprep.mubr.bf16.mxu0 0
        %1116 = vmatmul.mubr.bf16.gmra.mrb[0].mxu0 %v614
        %v1117 = vpop.f32.mrb[0].mxu0
        %v1118 = vadd.f32 %v957, %v1117
        %v1119 = vpop.f32.mrb[0].mxu0
        %v1120 = vpop.f32.mrb[0].mxu0
        %v1121 = vadd.f32 %v960, %v1120
        %v1122 = vpop.f32.mrb[0].mxu0
        %1123 = vmatprep.mubr.bf16.mxu0 0
        %1124 = vmatmul.mubr.bf16.gmra.mrb[0].mxu0 %v617
        %v1125 = vpop.f32.mrb[0].mxu0
        %v1126 = vadd.f32 %v965, %v1125
        %v1127 = vpop.f32.mrb[0].mxu0
        %v1128 = vpop.f32.mrb[0].mxu0
        %v1129 = vadd.f32 %v968, %v1128
        %v1130 = vpop.f32.mrb[0].mxu0
        %1131 = vdwg.mxu0
        %v1132 = vadd.f32 %v314, %v1006
        %v1133 = vadd.f32 %v315, %v1009
        %v1134 = vadd.f32 %v316, %v1014
        %v1135 = vadd.f32 %v317, %v1017
        %v1136 = vadd.f32 %v318, %v1022
        %v1137 = vadd.f32 %v319, %v1025
        %v1138 = vadd.f32 %v320, %v1030
        %v1139 = vadd.f32 %v321, %v1033
        %v1140 = vadd.f32 %v322, %v1038
        %v1141 = vadd.f32 %v323, %v1041
        %v1142 = vadd.f32 %v324, %v1046
        %v1143 = vadd.f32 %v325, %v1049
        %v1144 = vadd.f32 %v326, %v1054
        %v1145 = vadd.f32 %v327, %v1057
        %v1146 = vadd.f32 %v328, %v1062
        %v1147 = vadd.f32 %v329, %v1065
        %v1148 = vadd.f32 %v330, %v1070
        %v1149 = vadd.f32 %v331, %v1073
        %v1150 = vadd.f32 %v332, %v1078
        %v1151 = vadd.f32 %v333, %v1081
        %v1152 = vadd.f32 %v334, %v1086
        %v1153 = vadd.f32 %v335, %v1089
        %v1154 = vadd.f32 %v336, %v1094
        %v1155 = vadd.f32 %v337, %v1097
        %v1156 = vadd.f32 %v338, %v1102
        %v1157 = vadd.f32 %v339, %v1105
        %v1158 = vadd.f32 %v340, %v1110
        %v1159 = vadd.f32 %v341, %v1113
        %v1160 = vadd.f32 %v342, %v1118
        %v1161 = vadd.f32 %v343, %v1121
        %v1162 = vadd.f32 %v344, %v1126
        %v1163 = vadd.f32 %v345, %v1129
        %1164 = vst [vmem:[%s220] sm:$0xff] %v1132
        %1165 = vst [vmem:[%s220 + $0x8] sm:$0xff] %v1133
        %1166 = vst [vmem:[%s220 + $0x10] sm:$0xff] %v1134
        %1167 = vst [vmem:[%s220 + $0x18] sm:$0xff] %v1135
        %1168 = vst [vmem:[%s220 + $0x20] sm:$0xff] %v1136
        %1169 = vst [vmem:[%s220 + $0x28] sm:$0xff] %v1137
        %1170 = vst [vmem:[%s220 + $0x30] sm:$0xff] %v1138
        %1171 = vst [vmem:[%s220 + $0x38] sm:$0xff] %v1139
        %1172 = vst [vmem:[%s220 + $0x40] sm:$0xff] %v1140
        %1173 = vst [vmem:[%s220 + $0x48] sm:$0xff] %v1141
        %1174 = vst [vmem:[%s220 + $0x50] sm:$0xff] %v1142
        %1175 = vst [vmem:[%s220 + $0x58] sm:$0xff] %v1143
        %1176 = vst [vmem:[%s220 + $0x60] sm:$0xff] %v1144
        %1177 = vst [vmem:[%s220 + $0x68] sm:$0xff] %v1145
        %1178 = vst [vmem:[%s220 + $0x70] sm:$0xff] %v1146
        %1179 = vst [vmem:[%s220 + $0x78] sm:$0xff] %v1147
        %1180 = vst [vmem:[%s220 + $0x80] sm:$0xff] %v1148
        %1181 = vst [vmem:[%s220 + $0x88] sm:$0xff] %v1149
        %1182 = vst [vmem:[%s220 + $0x90] sm:$0xff] %v1150
        %1183 = vst [vmem:[%s220 + $0x98] sm:$0xff] %v1151
        %1184 = vst [vmem:[%s220 + $0xa0] sm:$0xff] %v1152
        %1185 = vst [vmem:[%s220 + $0xa8] sm:$0xff] %v1153
        %1186 = vst [vmem:[%s220 + $0xb0] sm:$0xff] %v1154
        %1187 = vst [vmem:[%s220 + $0xb8] sm:$0xff] %v1155
        %1188 = vst [vmem:[%s220 + $0xc0] sm:$0xff] %v1156
        %1189 = vst [vmem:[%s220 + $0xc8] sm:$0xff] %v1157
        %1190 = vst [vmem:[%s220 + $0xd0] sm:$0xff] %v1158
        %1191 = vst [vmem:[%s220 + $0xd8] sm:$0xff] %v1159
        %1192 = vst [vmem:[%s220 + $0xe0] sm:$0xff] %v1160
        %1193 = vst [vmem:[%s220 + $0xe8] sm:$0xff] %v1161
        %1194 = vst [vmem:[%s220 + $0xf0] sm:$0xff] %v1162
        %1195 = vst [vmem:[%s220 + $0xf8] sm:$0xff] %v1163
        // Predicated region
        $region45: #{tpu_custom_call.1} parent=31 // pred_check
          %p1196 = pneg %p225
        $region46: #{tpu_custom_call.1} parent=31 // pred_check_branch
          %1198 = sbr.rel (%p1196) target = $region48
        $region47: #{tpu_custom_call.1} parent=31 // pred_region
          %v1199 = vld [vmem:[%s220] sm:$0xff]
          %v1200 = vld [vmem:[%s220 + $0x8] sm:$0xff]
          %v1201 = vld [vmem:[%s220 + $0x10] sm:$0xff]
          %v1202 = vld [vmem:[%s220 + $0x18] sm:$0xff]
          %v1203 = vld [vmem:[%s220 + $0x20] sm:$0xff]
          %v1204 = vld [vmem:[%s220 + $0x28] sm:$0xff]
          %v1205 = vld [vmem:[%s220 + $0x30] sm:$0xff]
          %v1206 = vld [vmem:[%s220 + $0x38] sm:$0xff]
          %v1207 = vld [vmem:[%s220 + $0x40] sm:$0xff]
          %v1208 = vld [vmem:[%s220 + $0x48] sm:$0xff]
          %v1209 = vld [vmem:[%s220 + $0x50] sm:$0xff]
          %v1210 = vld [vmem:[%s220 + $0x58] sm:$0xff]
          %v1211 = vld [vmem:[%s220 + $0x60] sm:$0xff]
          %v1212 = vld [vmem:[%s220 + $0x68] sm:$0xff]
          %v1213 = vld [vmem:[%s220 + $0x70] sm:$0xff]
          %v1214 = vld [vmem:[%s220 + $0x78] sm:$0xff]
          %v1215 = vld [vmem:[%s220 + $0x80] sm:$0xff]
          %v1216 = vld [vmem:[%s220 + $0x88] sm:$0xff]
          %v1217 = vld [vmem:[%s220 + $0x90] sm:$0xff]
          %v1218 = vld [vmem:[%s220 + $0x98] sm:$0xff]
          %v1219 = vld [vmem:[%s220 + $0xa0] sm:$0xff]
          %v1220 = vld [vmem:[%s220 + $0xa8] sm:$0xff]
          %v1221 = vld [vmem:[%s220 + $0xb0] sm:$0xff]
          %v1222 = vld [vmem:[%s220 + $0xb8] sm:$0xff]
          %v1223 = vld [vmem:[%s220 + $0xc0] sm:$0xff]
          %v1224 = vld [vmem:[%s220 + $0xc8] sm:$0xff]
          %v1225 = vld [vmem:[%s220 + $0xd0] sm:$0xff]
          %v1226 = vld [vmem:[%s220 + $0xd8] sm:$0xff]
          %v1227 = vld [vmem:[%s220 + $0xe0] sm:$0xff]
          %v1228 = vld [vmem:[%s220 + $0xe8] sm:$0xff]
          %v1229 = vld [vmem:[%s220 + $0xf0] sm:$0xff]
          %v1230 = vld [vmem:[%s220 + $0xf8] sm:$0xff]
          %v1231 = vld [vmem:[%s2] sm:$0x1]
          %v1233 = vlaneseq
          %v1234 = vshrl.u32 %v1233, 7
          %v1235 = vsub.s32 0, %v1234
          %v1236 = vrot.slane %v1231, %v1235
          %v1238 = vadd.f32 %v1199, %v1236
          %v1239 = vadd.f32 %v1200, %v1236
          %v1240 = vadd.f32 %v1201, %v1236
          %v1241 = vadd.f32 %v1202, %v1236
          %v1242 = vadd.f32 %v1203, %v1236
          %v1243 = vadd.f32 %v1204, %v1236
          %v1244 = vadd.f32 %v1205, %v1236
          %v1245 = vadd.f32 %v1206, %v1236
          %v1246 = vadd.f32 %v1207, %v1236
          %v1247 = vadd.f32 %v1208, %v1236
          %v1248 = vadd.f32 %v1209, %v1236
          %v1249 = vadd.f32 %v1210, %v1236
          %v1250 = vadd.f32 %v1211, %v1236
          %v1251 = vadd.f32 %v1212, %v1236
          %v1252 = vadd.f32 %v1213, %v1236
          %v1253 = vadd.f32 %v1214, %v1236
          %v1254 = vadd.f32 %v1215, %v1236
          %v1255 = vadd.f32 %v1216, %v1236
          %v1256 = vadd.f32 %v1217, %v1236
          %v1257 = vadd.f32 %v1218, %v1236
          %v1258 = vadd.f32 %v1219, %v1236
          %v1259 = vadd.f32 %v1220, %v1236
          %v1260 = vadd.f32 %v1221, %v1236
          %v1261 = vadd.f32 %v1222, %v1236
          %v1262 = vadd.f32 %v1223, %v1236
          %v1263 = vadd.f32 %v1224, %v1236
          %v1264 = vadd.f32 %v1225, %v1236
          %v1265 = vadd.f32 %v1226, %v1236
          %v1266 = vadd.f32 %v1227, %v1236
          %v1267 = vadd.f32 %v1228, %v1236
          %v1268 = vadd.f32 %v1229, %v1236
          %v1269 = vadd.f32 %v1230, %v1236
          %v1270 = vlaneseq
          %v1271 = vand.u32 %v1270, 127
          %vm1272 = vcmp.lt.s32.totalorder %v1271, 7
          %v1273 = vsel %vm1272, %v1238, -inf
          %v1274 = vsel %vm1272, %v1239, -inf
          %v1275 = vsel %vm1272, %v1240, -inf
          %v1276 = vsel %vm1272, %v1241, -inf
          %v1277 = vsel %vm1272, %v1242, -inf
          %v1278 = vsel %vm1272, %v1243, -inf
          %v1279 = vsel %vm1272, %v1244, -inf
          %v1280 = vsel %vm1272, %v1245, -inf
          %v1281 = vsel %vm1272, %v1246, -inf
          %v1282 = vsel %vm1272, %v1247, -inf
          %v1283 = vsel %vm1272, %v1248, -inf
          %v1284 = vsel %vm1272, %v1249, -inf
          %v1285 = vsel %vm1272, %v1250, -inf
          %v1286 = vsel %vm1272, %v1251, -inf
          %v1287 = vsel %vm1272, %v1252, -inf
          %v1288 = vsel %vm1272, %v1253, -inf
          %v1289 = vsel %vm1272, %v1254, -inf
          %v1290 = vsel %vm1272, %v1255, -inf
          %v1291 = vsel %vm1272, %v1256, -inf
          %v1292 = vsel %vm1272, %v1257, -inf
          %v1293 = vsel %vm1272, %v1258, -inf
          %v1294 = vsel %vm1272, %v1259, -inf
          %v1295 = vsel %vm1272, %v1260, -inf
          %v1296 = vsel %vm1272, %v1261, -inf
          %v1297 = vsel %vm1272, %v1262, -inf
          %v1298 = vsel %vm1272, %v1263, -inf
          %v1299 = vsel %vm1272, %v1264, -inf
          %v1300 = vsel %vm1272, %v1265, -inf
          %v1301 = vsel %vm1272, %v1266, -inf
          %v1302 = vsel %vm1272, %v1267, -inf
          %v1303 = vsel %vm1272, %v1268, -inf
          %v1304 = vsel %vm1272, %v1269, -inf
          %1305 = vmax.xlane.f32.xlu0 %v1273
          %v1306 = vpop.xlane.xlu0 %1305
          %1307 = vmax.xlane.f32.xlu0 %v1274
          %v1308 = vpop.xlane.xlu0 %1307
          %1309 = vmax.xlane.f32.xlu0 %v1275
          %v1310 = vpop.xlane.xlu0 %1309
          %1311 = vmax.xlane.f32.xlu0 %v1276
          %v1312 = vpop.xlane.xlu0 %1311
          %1313 = vmax.xlane.f32.xlu0 %v1277
          %v1314 = vpop.xlane.xlu0 %1313
          %1315 = vmax.xlane.f32.xlu0 %v1278
          %v1316 = vpop.xlane.xlu0 %1315
          %1317 = vmax.xlane.f32.xlu0 %v1279
          %v1318 = vpop.xlane.xlu0 %1317
          %1319 = vmax.xlane.f32.xlu0 %v1280
          %v1320 = vpop.xlane.xlu0 %1319
          %1321 = vmax.xlane.f32.xlu0 %v1281
          %v1322 = vpop.xlane.xlu0 %1321
          %1323 = vmax.xlane.f32.xlu0 %v1282
          %v1324 = vpop.xlane.xlu0 %1323
          %1325 = vmax.xlane.f32.xlu0 %v1283
          %v1326 = vpop.xlane.xlu0 %1325
          %1327 = vmax.xlane.f32.xlu0 %v1284
          %v1328 = vpop.xlane.xlu0 %1327
          %1329 = vmax.xlane.f32.xlu0 %v1285
          %v1330 = vpop.xlane.xlu0 %1329
          %1331 = vmax.xlane.f32.xlu0 %v1286
          %v1332 = vpop.xlane.xlu0 %1331
          %1333 = vmax.xlane.f32.xlu0 %v1287
          %v1334 = vpop.xlane.xlu0 %1333
          %1335 = vmax.xlane.f32.xlu0 %v1288
          %v1336 = vpop.xlane.xlu0 %1335
          %1337 = vmax.xlane.f32.xlu0 %v1289
          %v1338 = vpop.xlane.xlu0 %1337
          %1339 = vmax.xlane.f32.xlu0 %v1290
          %v1340 = vpop.xlane.xlu0 %1339
          %1341 = vmax.xlane.f32.xlu0 %v1291
          %v1342 = vpop.xlane.xlu0 %1341
          %1343 = vmax.xlane.f32.xlu0 %v1292
          %v1344 = vpop.xlane.xlu0 %1343
          %1345 = vmax.xlane.f32.xlu0 %v1293
          %v1346 = vpop.xlane.xlu0 %1345
          %1347 = vmax.xlane.f32.xlu0 %v1294
          %v1348 = vpop.xlane.xlu0 %1347
          %1349 = vmax.xlane.f32.xlu0 %v1295
          %v1350 = vpop.xlane.xlu0 %1349
          %1351 = vmax.xlane.f32.xlu0 %v1296
          %v1352 = vpop.xlane.xlu0 %1351
          %1353 = vmax.xlane.f32.xlu0 %v1297
          %v1354 = vpop.xlane.xlu0 %1353
          %1355 = vmax.xlane.f32.xlu0 %v1298
          %v1356 = vpop.xlane.xlu0 %1355
          %1357 = vmax.xlane.f32.xlu0 %v1299
          %v1358 = vpop.xlane.xlu0 %1357
          %1359 = vmax.xlane.f32.xlu0 %v1300
          %v1360 = vpop.xlane.xlu0 %1359
          %1361 = vmax.xlane.f32.xlu0 %v1301
          %v1362 = vpop.xlane.xlu0 %1361
          %1363 = vmax.xlane.f32.xlu0 %v1302
          %v1364 = vpop.xlane.xlu0 %1363
          %1365 = vmax.xlane.f32.xlu0 %v1303
          %v1366 = vpop.xlane.xlu0 %1365
          %1367 = vmax.xlane.f32.xlu0 %v1304
          %v1368 = vpop.xlane.xlu0 %1367
          %v1369 = vsub.f32 %v1273, %v1306
          %v1370 = vsub.f32 %v1274, %v1308
          %v1371 = vsub.f32 %v1275, %v1310
          %v1372 = vsub.f32 %v1276, %v1312
          %v1373 = vsub.f32 %v1277, %v1314
          %v1374 = vsub.f32 %v1278, %v1316
          %v1375 = vsub.f32 %v1279, %v1318
          %v1376 = vsub.f32 %v1280, %v1320
          %v1377 = vsub.f32 %v1281, %v1322
          %v1378 = vsub.f32 %v1282, %v1324
          %v1379 = vsub.f32 %v1283, %v1326
          %v1380 = vsub.f32 %v1284, %v1328
          %v1381 = vsub.f32 %v1285, %v1330
          %v1382 = vsub.f32 %v1286, %v1332
          %v1383 = vsub.f32 %v1287, %v1334
          %v1384 = vsub.f32 %v1288, %v1336
          %v1385 = vsub.f32 %v1289, %v1338
          %v1386 = vsub.f32 %v1290, %v1340
          %v1387 = vsub.f32 %v1291, %v1342
          %v1388 = vsub.f32 %v1292, %v1344
          %v1389 = vsub.f32 %v1293, %v1346
          %v1390 = vsub.f32 %v1294, %v1348
          %v1391 = vsub.f32 %v1295, %v1350
          %v1392 = vsub.f32 %v1296, %v1352
          %v1393 = vsub.f32 %v1297, %v1354
          %v1394 = vsub.f32 %v1298, %v1356
          %v1395 = vsub.f32 %v1299, %v1358
          %v1396 = vsub.f32 %v1300, %v1360
          %v1397 = vsub.f32 %v1301, %v1362
          %v1398 = vsub.f32 %v1302, %v1364
          %v1399 = vsub.f32 %v1303, %v1366
          %v1400 = vsub.f32 %v1304, %v1368
          %v1401 = vmul.f32 %v1369, 1.442695
          %v1402 = vpow.pop %v1401
          %v1403 = vmul.f32 %v1370, 1.442695
          %v1404 = vpow.pop %v1403
          %v1405 = vmul.f32 %v1371, 1.442695
          %v1406 = vpow.pop %v1405
          %v1407 = vmul.f32 %v1372, 1.442695
          %v1408 = vpow.pop %v1407
          %v1409 = vmul.f32 %v1373, 1.442695
          %v1410 = vpow.pop %v1409
          %v1411 = vmul.f32 %v1374, 1.442695
          %v1412 = vpow.pop %v1411
          %v1413 = vmul.f32 %v1375, 1.442695
          %v1414 = vpow.pop %v1413
          %v1415 = vmul.f32 %v1376, 1.442695
          %v1416 = vpow.pop %v1415
          %v1417 = vmul.f32 %v1377, 1.442695
          %v1418 = vpow.pop %v1417
          %v1419 = vmul.f32 %v1378, 1.442695
          %v1420 = vpow.pop %v1419
          %v1421 = vmul.f32 %v1379, 1.442695
          %v1422 = vpow.pop %v1421
          %v1423 = vmul.f32 %v1380, 1.442695
          %v1424 = vpow.pop %v1423
          %v1425 = vmul.f32 %v1381, 1.442695
          %v1426 = vpow.pop %v1425
          %v1427 = vmul.f32 %v1382, 1.442695
          %v1428 = vpow.pop %v1427
          %v1429 = vmul.f32 %v1383, 1.442695
          %v1430 = vpow.pop %v1429
          %v1431 = vmul.f32 %v1384, 1.442695
          %v1432 = vpow.pop %v1431
          %v1433 = vmul.f32 %v1385, 1.442695
          %v1434 = vpow.pop %v1433
          %v1435 = vmul.f32 %v1386, 1.442695
          %v1436 = vpow.pop %v1435
          %v1437 = vmul.f32 %v1387, 1.442695
          %v1438 = vpow.pop %v1437
          %v1439 = vmul.f32 %v1388, 1.442695
          %v1440 = vpow.pop %v1439
          %v1441 = vmul.f32 %v1389, 1.442695
          %v1442 = vpow.pop %v1441
          %v1443 = vmul.f32 %v1390, 1.442695
          %v1444 = vpow.pop %v1443
          %v1445 = vmul.f32 %v1391, 1.442695
          %v1446 = vpow.pop %v1445
          %v1447 = vmul.f32 %v1392, 1.442695
          %v1448 = vpow.pop %v1447
          %v1449 = vmul.f32 %v1393, 1.442695
          %v1450 = vpow.pop %v1449
          %v1451 = vmul.f32 %v1394, 1.442695
          %v1452 = vpow.pop %v1451
          %v1453 = vmul.f32 %v1395, 1.442695
          %v1454 = vpow.pop %v1453
          %v1455 = vmul.f32 %v1396, 1.442695
          %v1456 = vpow.pop %v1455
          %v1457 = vmul.f32 %v1397, 1.442695
          %v1458 = vpow.pop %v1457
          %v1459 = vmul.f32 %v1398, 1.442695
          %v1460 = vpow.pop %v1459
          %v1461 = vmul.f32 %v1399, 1.442695
          %v1462 = vpow.pop %v1461
          %v1463 = vmul.f32 %v1400, 1.442695
          %v1464 = vpow.pop %v1463
          %1465 = vadd.xlane.f32.xlu0 %v1402
          %v1466 = vpop.xlane.xlu0 %1465
          %1467 = vadd.xlane.f32.xlu0 %v1404
          %v1468 = vpop.xlane.xlu0 %1467
          %1469 = vadd.xlane.f32.xlu0 %v1406
          %v1470 = vpop.xlane.xlu0 %1469
          %1471 = vadd.xlane.f32.xlu0 %v1408
          %v1472 = vpop.xlane.xlu0 %1471
          %1473 = vadd.xlane.f32.xlu0 %v1410
          %v1474 = vpop.xlane.xlu0 %1473
          %1475 = vadd.xlane.f32.xlu0 %v1412
          %v1476 = vpop.xlane.xlu0 %1475
          %1477 = vadd.xlane.f32.xlu0 %v1414
          %v1478 = vpop.xlane.xlu0 %1477
          %1479 = vadd.xlane.f32.xlu0 %v1416
          %v1480 = vpop.xlane.xlu0 %1479
          %1481 = vadd.xlane.f32.xlu0 %v1418
          %v1482 = vpop.xlane.xlu0 %1481
          %1483 = vadd.xlane.f32.xlu0 %v1420
          %v1484 = vpop.xlane.xlu0 %1483
          %1485 = vadd.xlane.f32.xlu0 %v1422
          %v1486 = vpop.xlane.xlu0 %1485
          %1487 = vadd.xlane.f32.xlu0 %v1424
          %v1488 = vpop.xlane.xlu0 %1487
          %1489 = vadd.xlane.f32.xlu0 %v1426
          %v1490 = vpop.xlane.xlu0 %1489
          %1491 = vadd.xlane.f32.xlu0 %v1428
          %v1492 = vpop.xlane.xlu0 %1491
          %1493 = vadd.xlane.f32.xlu0 %v1430
          %v1494 = vpop.xlane.xlu0 %1493
          %1495 = vadd.xlane.f32.xlu0 %v1432
          %v1496 = vpop.xlane.xlu0 %1495
          %1497 = vadd.xlane.f32.xlu0 %v1434
          %v1498 = vpop.xlane.xlu0 %1497
          %1499 = vadd.xlane.f32.xlu0 %v1436
          %v1500 = vpop.xlane.xlu0 %1499
          %1501 = vadd.xlane.f32.xlu0 %v1438
          %v1502 = vpop.xlane.xlu0 %1501
          %1503 = vadd.xlane.f32.xlu0 %v1440
          %v1504 = vpop.xlane.xlu0 %1503
          %1505 = vadd.xlane.f32.xlu0 %v1442
          %v1506 = vpop.xlane.xlu0 %1505
          %1507 = vadd.xlane.f32.xlu0 %v1444
          %v1508 = vpop.xlane.xlu0 %1507
          %1509 = vadd.xlane.f32.xlu0 %v1446
          %v1510 = vpop.xlane.xlu0 %1509
          %1511 = vadd.xlane.f32.xlu0 %v1448
          %v1512 = vpop.xlane.xlu0 %1511
          %1513 = vadd.xlane.f32.xlu0 %v1450
          %v1514 = vpop.xlane.xlu0 %1513
          %1515 = vadd.xlane.f32.xlu0 %v1452
          %v1516 = vpop.xlane.xlu0 %1515
          %1517 = vadd.xlane.f32.xlu0 %v1454
          %v1518 = vpop.xlane.xlu0 %1517
          %1519 = vadd.xlane.f32.xlu0 %v1456
          %v1520 = vpop.xlane.xlu0 %1519
          %1521 = vadd.xlane.f32.xlu0 %v1458
          %v1522 = vpop.xlane.xlu0 %1521
          %1523 = vadd.xlane.f32.xlu0 %v1460
          %v1524 = vpop.xlane.xlu0 %1523
          %1525 = vadd.xlane.f32.xlu0 %v1462
          %v1526 = vpop.xlane.xlu0 %1525
          %1527 = vadd.xlane.f32.xlu0 %v1464
          %v1528 = vpop.xlane.xlu0 %1527
          %v1529 = vlog2.pop %v1466
          %v1530 = vmul.f32 %v1529, 0.6931472
          %v1531 = vlog2.pop %v1468
          %v1532 = vmul.f32 %v1531, 0.6931472
          %v1533 = vlog2.pop %v1470
          %v1534 = vmul.f32 %v1533, 0.6931472
          %v1535 = vlog2.pop %v1472
          %v1536 = vmul.f32 %v1535, 0.6931472
          %v1537 = vlog2.pop %v1474
          %v1538 = vmul.f32 %v1537, 0.6931472
          %v1539 = vlog2.pop %v1476
          %v1540 = vmul.f32 %v1539, 0.6931472
          %v1541 = vlog2.pop %v1478
          %v1542 = vmul.f32 %v1541, 0.6931472
          %v1543 = vlog2.pop %v1480
          %v1544 = vmul.f32 %v1543, 0.6931472
          %v1545 = vlog2.pop %v1482
          %v1546 = vmul.f32 %v1545, 0.6931472
          %v1547 = vlog2.pop %v1484
          %v1548 = vmul.f32 %v1547, 0.6931472
          %v1549 = vlog2.pop %v1486
          %v1550 = vmul.f32 %v1549, 0.6931472
          %v1551 = vlog2.pop %v1488
          %v1552 = vmul.f32 %v1551, 0.6931472
          %v1553 = vlog2.pop %v1490
          %v1554 = vmul.f32 %v1553, 0.6931472
          %v1555 = vlog2.pop %v1492
          %v1556 = vmul.f32 %v1555, 0.6931472
          %v1557 = vlog2.pop %v1494
          %v1558 = vmul.f32 %v1557, 0.6931472
          %v1559 = vlog2.pop %v1496
          %v1560 = vmul.f32 %v1559, 0.6931472
          %v1561 = vlog2.pop %v1498
          %v1562 = vmul.f32 %v1561, 0.6931472
          %v1563 = vlog2.pop %v1500
          %v1564 = vmul.f32 %v1563, 0.6931472
          %v1565 = vlog2.pop %v1502
          %v1566 = vmul.f32 %v1565, 0.6931472
          %v1567 = vlog2.pop %v1504
          %v1568 = vmul.f32 %v1567, 0.6931472
          %v1569 = vlog2.pop %v1506
          %v1570 = vmul.f32 %v1569, 0.6931472
          %v1571 = vlog2.pop %v1508
          %v1572 = vmul.f32 %v1571, 0.6931472
          %v1573 = vlog2.pop %v1510
          %v1574 = vmul.f32 %v1573, 0.6931472
          %v1575 = vlog2.pop %v1512
          %v1576 = vmul.f32 %v1575, 0.6931472
          %v1577 = vlog2.pop %v1514
          %v1578 = vmul.f32 %v1577, 0.6931472
          %v1579 = vlog2.pop %v1516
          %v1580 = vmul.f32 %v1579, 0.6931472
          %v1581 = vlog2.pop %v1518
          %v1582 = vmul.f32 %v1581, 0.6931472
          %v1583 = vlog2.pop %v1520
          %v1584 = vmul.f32 %v1583, 0.6931472
          %v1585 = vlog2.pop %v1522
          %v1586 = vmul.f32 %v1585, 0.6931472
          %v1587 = vlog2.pop %v1524
          %v1588 = vmul.f32 %v1587, 0.6931472
          %v1589 = vlog2.pop %v1526
          %v1590 = vmul.f32 %v1589, 0.6931472
          %v1591 = vlog2.pop %v1528
          %v1592 = vmul.f32 %v1591, 0.6931472
          %v1593 = vadd.f32 %v1530, %v1306
          %v1594 = vadd.f32 %v1532, %v1308
          %v1595 = vadd.f32 %v1534, %v1310
          %v1596 = vadd.f32 %v1536, %v1312
          %v1597 = vadd.f32 %v1538, %v1314
          %v1598 = vadd.f32 %v1540, %v1316
          %v1599 = vadd.f32 %v1542, %v1318
          %v1600 = vadd.f32 %v1544, %v1320
          %v1601 = vadd.f32 %v1546, %v1322
          %v1602 = vadd.f32 %v1548, %v1324
          %v1603 = vadd.f32 %v1550, %v1326
          %v1604 = vadd.f32 %v1552, %v1328
          %v1605 = vadd.f32 %v1554, %v1330
          %v1606 = vadd.f32 %v1556, %v1332
          %v1607 = vadd.f32 %v1558, %v1334
          %v1608 = vadd.f32 %v1560, %v1336
          %v1609 = vadd.f32 %v1562, %v1338
          %v1610 = vadd.f32 %v1564, %v1340
          %v1611 = vadd.f32 %v1566, %v1342
          %v1612 = vadd.f32 %v1568, %v1344
          %v1613 = vadd.f32 %v1570, %v1346
          %v1614 = vadd.f32 %v1572, %v1348
          %v1615 = vadd.f32 %v1574, %v1350
          %v1616 = vadd.f32 %v1576, %v1352
          %v1617 = vadd.f32 %v1578, %v1354
          %v1618 = vadd.f32 %v1580, %v1356
          %v1619 = vadd.f32 %v1582, %v1358
          %v1620 = vadd.f32 %v1584, %v1360
          %v1621 = vadd.f32 %v1586, %v1362
          %v1622 = vadd.f32 %v1588, %v1364
          %v1623 = vadd.f32 %v1590, %v1366
          %v1624 = vadd.f32 %v1592, %v1368
          %v1625 = vsub.f32 %v1273, %v1593
          %v1626 = vsub.f32 %v1274, %v1594
          %v1627 = vsub.f32 %v1275, %v1595
          %v1628 = vsub.f32 %v1276, %v1596
          %v1629 = vsub.f32 %v1277, %v1597
          %v1630 = vsub.f32 %v1278, %v1598
          %v1631 = vsub.f32 %v1279, %v1599
          %v1632 = vsub.f32 %v1280, %v1600
          %v1633 = vsub.f32 %v1281, %v1601
          %v1634 = vsub.f32 %v1282, %v1602
          %v1635 = vsub.f32 %v1283, %v1603
          %v1636 = vsub.f32 %v1284, %v1604
          %v1637 = vsub.f32 %v1285, %v1605
          %v1638 = vsub.f32 %v1286, %v1606
          %v1639 = vsub.f32 %v1287, %v1607
          %v1640 = vsub.f32 %v1288, %v1608
          %v1641 = vsub.f32 %v1289, %v1609
          %v1642 = vsub.f32 %v1290, %v1610
          %v1643 = vsub.f32 %v1291, %v1611
          %v1644 = vsub.f32 %v1292, %v1612
          %v1645 = vsub.f32 %v1293, %v1613
          %v1646 = vsub.f32 %v1294, %v1614
          %v1647 = vsub.f32 %v1295, %v1615
          %v1648 = vsub.f32 %v1296, %v1616
          %v1649 = vsub.f32 %v1297, %v1617
          %v1650 = vsub.f32 %v1298, %v1618
          %v1651 = vsub.f32 %v1299, %v1619
          %v1652 = vsub.f32 %v1300, %v1620
          %v1653 = vsub.f32 %v1301, %v1621
          %v1654 = vsub.f32 %v1302, %v1622
          %v1655 = vsub.f32 %v1303, %v1623
          %v1656 = vsub.f32 %v1304, %v1624
          %1657 = vst [vmem:[%s220] sm:$0xff] %v1625
          %1658 = vst [vmem:[%s220 + $0x8] sm:$0xff] %v1626
          %1659 = vst [vmem:[%s220 + $0x10] sm:$0xff] %v1627
          %1660 = vst [vmem:[%s220 + $0x18] sm:$0xff] %v1628
          %1661 = vst [vmem:[%s220 + $0x20] sm:$0xff] %v1629
          %1662 = vst [vmem:[%s220 + $0x28] sm:$0xff] %v1630
          %1663 = vst [vmem:[%s220 + $0x30] sm:$0xff] %v1631
          %1664 = vst [vmem:[%s220 + $0x38] sm:$0xff] %v1632
          %1665 = vst [vmem:[%s220 + $0x40] sm:$0xff] %v1633
          %1666 = vst [vmem:[%s220 + $0x48] sm:$0xff] %v1634
          %1667 = vst [vmem:[%s220 + $0x50] sm:$0xff] %v1635
          %1668 = vst [vmem:[%s220 + $0x58] sm:$0xff] %v1636
          %1669 = vst [vmem:[%s220 + $0x60] sm:$0xff] %v1637
          %1670 = vst [vmem:[%s220 + $0x68] sm:$0xff] %v1638
          %1671 = vst [vmem:[%s220 + $0x70] sm:$0xff] %v1639
          %1672 = vst [vmem:[%s220 + $0x78] sm:$0xff] %v1640
          %1673 = vst [vmem:[%s220 + $0x80] sm:$0xff] %v1641
          %1674 = vst [vmem:[%s220 + $0x88] sm:$0xff] %v1642
          %1675 = vst [vmem:[%s220 + $0x90] sm:$0xff] %v1643
          %1676 = vst [vmem:[%s220 + $0x98] sm:$0xff] %v1644
          %1677 = vst [vmem:[%s220 + $0xa0] sm:$0xff] %v1645
          %1678 = vst [vmem:[%s220 + $0xa8] sm:$0xff] %v1646
          %1679 = vst [vmem:[%s220 + $0xb0] sm:$0xff] %v1647
          %1680 = vst [vmem:[%s220 + $0xb8] sm:$0xff] %v1648
          %1681 = vst [vmem:[%s220 + $0xc0] sm:$0xff] %v1649
          %1682 = vst [vmem:[%s220 + $0xc8] sm:$0xff] %v1650
          %1683 = vst [vmem:[%s220 + $0xd0] sm:$0xff] %v1651
          %1684 = vst [vmem:[%s220 + $0xd8] sm:$0xff] %v1652
          %1685 = vst [vmem:[%s220 + $0xe0] sm:$0xff] %v1653
          %1686 = vst [vmem:[%s220 + $0xe8] sm:$0xff] %v1654
          %1687 = vst [vmem:[%s220 + $0xf0] sm:$0xff] %v1655
          %1688 = vst [vmem:[%s220 + $0xf8] sm:$0xff] %v1656
        $region48: #{tpu_custom_call.1} parent=31 // pred_fallthru
          _
        %s1689 = sand.u32 %s111, 1
        %s1690 = scalar_lea.sflag [#allocation4], %s1689
        %s1691 = sand.u32 %s111, 1
        %s1692 = smul.addr %s1691, 256
        %s1693 = scalar_lea.vmem [#allocation7], %s1692
        // Predicated region
        $region49: #{tpu_custom_call.1} parent=31 // pred_check
          %p1694 = pneg %p121
        $region50: #{tpu_custom_call.1} parent=31 // pred_check_branch
          %1696 = sbr.rel (%p1694) target = $region52
        $region51: #{tpu_custom_call.1} parent=31 // pred_region
          %s1697 = smul.u32 32, %s25
          %s1699 = ssub.s32 4096, 4096
          %1700 = vsyncadd %s1690, %s1699
          %s1701 = smul.addr %s1697, 128
          %s1702 = scalar_lea.hbm %s3, %s1701
          %s1703 = sshll.u32 %s1693, 4
          %s1704 = int_to_ptr.vmem [resolvable:$true] %s1703
          %1709 = dma.vmem_to_hbm [thread:$0]  %s1704, 4096, %s1702, %s1690, 128, 128, 8
        $region52: #{tpu_custom_call.1} parent=31 // pred_fallthru
          _
      $region32: #{tpu_custom_call.1} parent=5 // pred_fallthru
        _
      %p1710 = scmp.le.s32.totalorder 2, %s16
      // Predicated region
      $region53: #{tpu_custom_call.1} parent=5 // pred_check
        %p1711 = pneg %p1710
      $region54: #{tpu_custom_call.1} parent=5 // pred_check_branch
        %1713 = sbr.rel (%p1711) target = $region56
      $region55: #{tpu_custom_call.1} parent=5 // pred_region
        %s1714 = ssub.s32 %s16, 2
        // Predicated region
        $region57: #{tpu_custom_call.1} parent=55 // pred_check
          %p1715 = pneg %p127
        $region58: #{tpu_custom_call.1} parent=55 // pred_check_branch
          %1717 = sbr.rel (%p1715) target = $region60
        $region59: #{tpu_custom_call.1} parent=55 // pred_region
          %s1718 = sand.u32 %s112, 1
          %s1719 = scalar_lea.sflag [#allocation4], %s1718
          %s1720 = sand.u32 %s112, 1
          %s1721 = smul.addr %s1720, 256
          %s1722 = scalar_lea.vmem [#allocation7], %s1721
          %1723 = dma.done %s1719, 4096
        $region60: #{tpu_custom_call.1} parent=55 // pred_fallthru
          _
      $region56: #{tpu_custom_call.1} parent=5 // pred_fallthru
        _
    $region6: #{tpu_custom_call.1} parent=1 // loop_footer
      %s20 = sadd.s32 1, %s16
    $region7: #{tpu_custom_call.1} parent=1 // loop_footer_branch
      %15 = sbr.rel target = $region3
    $region8: #{tpu_custom_call.1} parent=1 // loop_exit
      _
    %1724 = vsyncpa [#allocation3], 1
    %s1725 = scalar_lea.sflag [#allocation3], 1
    %1726 = vsyncpa %s1725, 1
    %1727 = vsyncpa [#allocation6], 1
    %1728 = vsyncpa [#allocation4], 1
    %s1729 = scalar_lea.sflag [#allocation4], 1
    %1730 = vsyncpa %s1729, 1

</llo_original>
